<compile_context>
chip_gen: v6e
topology: v6e:2x2x1
jax: 0.10.0
libtpu: 0.0.40
codegen_flags: <defaults>
</compile_context>

<pallas_src>
import functools
import math

import jax
import jax.numpy as jnp
from jax.experimental import pallas as pl
from jax.experimental.pallas import tpu as pltpu

OUT_W = 128  # one lane tile: output slab width and the width of every packed block


# ------------------------------ fused kernel --------------------------------

def _fused_kernel(x_ref, w_ref, o_ref, *, kmax, lw, khp):
    """Entire Net.forward after the frozen BERT encoder (eval: dropout = identity).

    x_ref : (Bt, S, H)  activation block
    w_ref : (rows, 128) packed weight slab (see prepare_fused_inputs for layout)
    o_ref : (Bt, 128)   all task logits, lane-dense
    """
    f32 = jnp.float32
    B, S, H = x_ref.shape
    KH = kmax * H

    # static row offsets into the packed slab
    r_wc = 0                       # conv weight        (khp, 128)
    r_w1 = r_wc + khp              # stacked fc1        (128, 128)
    r_w2 = r_w1 + OUT_W            # block-diag fc2     (128, 128)
    r_wv = r_w2 + OUT_W            # scaled Vf1         (128, 128)
    r_wu = r_wv + OUT_W            # Uf1 (placed at column-t block)
    r_wh = r_wu + OUT_W            # fused heads        (128, 128)
    r_aux = r_wh + OUT_W           # 6 bias rows + Lw mask rows

    # ---- im2col: (B, Lw, KMAX*H) windows of the zero time-padded input.
    x = x_ref[...].astype(f32)
    pad_t = lw + kmax - 1 - S
    if pad_t > 0:
        x = jnp.concatenate([x, jnp.zeros((B, pad_t, H), f32)], axis=1)
    parts = [x[:, dk:dk + lw, :] for dk in range(kmax)]
    if khp > KH:
        parts.append(jnp.zeros((B, lw, khp - KH), f32))
    win = jnp.concatenate(parts, axis=-1).reshape(B * lw, khp)

    # ---- conv (all kernel sizes & channels) in ONE MXU pass + relu + masked max-pool.
    wc = w_ref[r_wc:r_wc + khp, :]
    bc = w_ref[r_aux + 0:r_aux + 1, :]
    mask = w_ref[r_aux + 6:r_aux + 6 + lw, :]
    conv = jnp.dot(win, wc, preferred_element_type=f32).reshape(B, lw, OUT_W)
    conv = jnp.maximum(conv + bc[None], 0.0) * mask[None]
    h_in = jnp.max(conv, axis=1)                                   # (B, 128)

    # ---- fc1 for every PNN column (wide, zero-padded).
    w1 = w_ref[r_w1:r_w1 + OUT_W, :]
    b1 = w_ref[r_aux + 1:r_aux + 2, :]
    h_all = jnp.maximum(jnp.dot(h_in, w1, preferred_element_type=f32) + b1, 0.0)

    # ---- fc2 for every column (block-diagonal).
    w2 = w_ref[r_w2:r_w2 + OUT_W, :]
    b2 = w_ref[r_aux + 2:r_aux + 3, :]
    hf_all = jnp.dot(h_all, w2, preferred_element_type=f32) + b2

    # ---- lateral Vf1 (scales folded into weights) -> relu -> Uf1 placed into the
    #      active column's block; zero blocks make this a no-op when t == 0.
    wv = w_ref[r_wv:r_wv + OUT_W, :]
    bv = w_ref[r_aux + 3:r_aux + 4, :]
    v = jnp.maximum(jnp.dot(h_all, wv, preferred_element_type=f32) + bv, 0.0)
    wu = w_ref[r_wu:r_wu + OUT_W, :]
    bu = w_ref[r_aux + 4:r_aux + 5, :]
    g = jnp.maximum(hf_all + jnp.dot(v, wu, preferred_element_type=f32) + bu, 0.0)

    # ---- all task heads (+ offline-composed Vfl∘Ufl laterals, scales folded in)
    #      in ONE matmul, written as a single unmasked lane-dense store.
    wh = w_ref[r_wh:r_wh + OUT_W, :]
    bh = w_ref[r_aux + 5:r_aux + 6, :]
    o_ref[...] = jnp.dot(g, wh, preferred_element_type=f32) + bh


# -------------------- one-time parameter re-layout ---------------------------

def prepare_fused_inputs(params, t, taskcla, seq_len, ks=(2, 3, 4)):
    """Pack every weight/bias/scale/mask into one lane-dense (rows, 128) slab."""
    f32 = jnp.float32
    hi = jax.lax.Precision.HIGHEST
    kmin, kmax = min(ks), max(ks)
    C = 2 * len(ks)
    Lw = seq_len - kmin + 1
    H = params['convs'][0][0].shape[1]
    KH = kmax * H
    KHp = OUT_W * pl.cdiv(KH, OUT_W)
    F1 = params['fc1'][0][0].shape[0]
    F2 = params['fc2'][0][0].shape[0]
    ncls = tuple(n for _, n in taskcla)
    # Scaling guard (per review): the 128-wide zero-padded blocks are only "free"
    # while every logical width fits in one lane tile.
    assert C <= OUT_W and (t + 1) * F1 <= OUT_W and (t + 1) * F2 <= OUT_W
    assert sum(ncls) <= OUT_W and Lw >= 1

    wc = jnp.zeros((KHp, OUT_W), f32)
    bc = jnp.zeros((1, OUT_W), f32)
    mask = jnp.zeros((Lw, OUT_W), f32)
    for ci, ((w, b), k) in enumerate(zip(params['convs'], ks)):
        # w: (k, H, 2); im2col column dk*H + h pairs with w[dk, h, :]
        wc = wc.at[:k * H, 2 * ci:2 * ci + 2].set(w.reshape(k * H, 2))
        bc = bc.at[0, 2 * ci:2 * ci + 2].set(b.reshape(2))
        mask = mask.at[:seq_len - k + 1, 2 * ci:2 * ci + 2].set(1.0)

    w1 = jnp.zeros((OUT_W, OUT_W), f32); b1 = jnp.zeros((1, OUT_W), f32)
    w2 = jnp.zeros((OUT_W, OUT_W), f32); b2 = jnp.zeros((1, OUT_W), f32)
    for j in range(t + 1):
        wj, bj = params['fc1'][j]
        w1 = w1.at[:C, j * F1:(j + 1) * F1].set(wj.T)
        b1 = b1.at[0, j * F1:(j + 1) * F1].set(bj)
        wj, bj = params['fc2'][j]
        w2 = w2.at[j * F1:(j + 1) * F1, j * F2:(j + 1) * F2].set(wj.T)
        b2 = b2.at[0, j * F2:(j + 1) * F2].set(bj)

    wv = jnp.zeros((OUT_W, OUT_W), f32); bv = jnp.zeros((1, OUT_W), f32)
    wu = jnp.zeros((OUT_W, OUT_W), f32); bu = jnp.zeros((1, OUT_W), f32)
    if t > 0:
        scale1 = jnp.repeat(params['Vf1scale'][t - 1][0], F1)[:, None]   # (t*F1, 1)
        wvt = params['Vf1'][t - 1][0].T                                  # (t*F1, F1)
        wv = wv.at[:t * F1, :F1].set(scale1 * wvt)
        bv = bv.at[0, :F1].set(params['Vf1'][t - 1][1])
        # NOTE: Vf1 -> Uf1 has a ReLU in between, so it is NOT composed offline.
        wut = params['Uf1'][t - 1][0].T                                  # (F1, F1==F2)
        wu = wu.at[:wut.shape[0], t * F2:t * F2 + wut.shape[1]].set(wut)
        but = params['Uf1'][t - 1][1]
        bu = bu.at[0, t * F2:t * F2 + but.shape[0]].set(but)

    wh = jnp.zeros((OUT_W, OUT_W), f32); bh = jnp.zeros((1, OUT_W), f32)
    off = 0
    for tid, n in taskcla:
        wl, bl = params['last'][tid]
        if t > 0 and tid < t:
            wh = wh.at[tid * F2:(tid + 1) * F2, off:off + n].set(wl.T)
            bh = bh.at[0, off:off + n].set(bl)
            if tid > 0:
                wvf, bvf = params['Vfl'][tid - 1]        # (F2, tid*F2), (F2,)
                wuf, buf = params['Ufl'][tid - 1]        # (n, F2), (n,)
                comp = jnp.dot(wvf.T, wuf.T, precision=hi)            # Vfl∘Ufl, (tid*F2, n)
                scl = jnp.repeat(params['Vflscale'][tid - 1][0], F2)[:, None]
                wh = wh.at[:tid * F2, off:off + n].add(scl * comp)
                bh = bh.at[0, off:off + n].add(jnp.dot(bvf, wuf.T, precision=hi) + buf)
        else:
            wh = wh.at[t * F2:(t + 1) * F2, off:off + n].set(wl.T)
            bh = bh.at[0, off:off + n].set(bl)
        off += n

    aux = jnp.concatenate([bc, b1, b2, bv, bu, bh, mask], axis=0)
    aux_pad = (-aux.shape[0]) % 8
    if aux_pad:
        aux = jnp.concatenate([aux, jnp.zeros((aux_pad, OUT_W), f32)], axis=0)
    slab = jnp.concatenate([wc, w1, w2, wv, wu, wh, aux], axis=0)
    return {'slab': slab, 'ncls': ncls, 'static': dict(kmax=kmax, lw=Lw, khp=KHp)}


# -------------------------------- forward ------------------------------------

def net_forward(sequence_output, fused):
    """Single fused pallas_call over a parallel batch grid (block = 8 rows)."""
    # TODO(synk): the frozen pretrained BertModel encoder cannot be reproduced
    # in-script; the kernel consumes its sequence_output [B, S, H] directly
    # (drop1/drop2 are identity at inference time).
    B, S, H = sequence_output.shape
    BT = 8
    B_pad = BT * pl.cdiv(B, BT)
    x = sequence_output.astype(jnp.float32)
    if B_pad > B:
        x = jnp.concatenate([x, jnp.zeros((B_pad - B, S, H), jnp.float32)], axis=0)
    slab = fused['slab']
    rows = slab.shape[0]
    kernel = functools.partial(_fused_kernel, **fused['static'])
    logits = pl.pallas_call(
        kernel,
        grid=(B_pad // BT,),
        in_specs=[pl.BlockSpec((BT, S, H), lambda b: (b, 0, 0)),
                  pl.BlockSpec((rows, OUT_W), lambda b: (0, 0))],
        out_specs=pl.BlockSpec((BT, OUT_W), lambda b: (b, 0)),
        out_shape=jax.ShapeDtypeStruct((B_pad, OUT_W), jnp.float32),
        compiler_params=pltpu.CompilerParams(
            dimension_semantics=("parallel",),
            vmem_limit_bytes=32 * 1024 * 1024),
    )(x, slab)
    ys, off = [], 0
    for n in fused['ncls']:
        ys.append(logits[:B, off:off + n])
        off += n
    return ys


# ------------------------- parameter construction ----------------------------

def _init_linear(key, din, dout):
    kw, kb = jax.random.split(key)
    bound = 1.0 / math.sqrt(din)
    w = jax.random.uniform(kw, (dout, din), jnp.float32, -bound, bound)
    b = jax.random.uniform(kb, (dout,), jnp.float32, -bound, bound)
    return w, b


def init_params(key, taskcla, nhid, sizefc1, sizefc2, ks=(2, 3, 4)):
    params = {'convs': [], 'fc1': [], 'fc2': [], 'last': [],
              'Vf1scale': [], 'Vf1': [], 'Uf1': [],
              'Vflscale': [], 'Vfl': [], 'Ufl': []}
    keys = iter(jax.random.split(key, 64))
    for k in ks:                                   # nn.Conv2d(1, 2, (k, nhid))
        fan_in = 1 * k * nhid
        bound = 1.0 / math.sqrt(fan_in)
        w = jax.random.uniform(next(keys), (2, 1, k, nhid), jnp.float32, -bound, bound)
        b = jax.random.uniform(next(keys), (2,), jnp.float32, -bound, bound)
        # (out, in=1, k, H) -> (k, H, out) layout for the kernel/reference
        params['convs'].append((jnp.transpose(w[:, 0], (1, 2, 0)),
                                b.reshape(1, 1, 2)))
    for t, n in taskcla:
        params['fc1'].append(_init_linear(next(keys), 1 * 2 * len(ks), sizefc1))
        params['fc2'].append(_init_linear(next(keys), sizefc1, sizefc2))
        params['last'].append(_init_linear(next(keys), sizefc2, n))
        if t > 0:
            params['Vf1scale'].append(jax.random.normal(next(keys), (1, t), jnp.float32))
            params['Vf1'].append(_init_linear(next(keys), t * sizefc1, sizefc1))
            params['Uf1'].append(_init_linear(next(keys), sizefc1, sizefc1))
            params['Vflscale'].append(jax.random.normal(next(keys), (1, t), jnp.float32))
            params['Vfl'].append(_init_linear(next(keys), t * sizefc2, sizefc2))
            params['Ufl'].append(_init_linear(next(keys), sizefc2, n))
    return params


# ------------------------- pure-JAX reference (check) ------------------------

def _ref_linear(x, wb, relu_in=False, relu_out=False):
    w, b = wb
    if relu_in:
        x = jnp.maximum(x, 0.0)
    y = x @ w.T + b
    if relu_out:
        y = jnp.maximum(y, 0.0)
    return y


def net_forward_ref(sequence_output, params, t, taskcla):
    B, S, H = sequence_output.shape
    pooled = []
    for (w, b) in params['convs']:
        k = int(w.shape[0])
        L = S - k + 1
        acc = jnp.zeros((B, L, 2), jnp.float32)
        for dk in range(k):
            acc = acc + jnp.einsum('bsh,ho->bso',
                                   sequence_output[:, dk:dk + L, :], w[dk])
        acc = jnp.maximum(acc + b, 0.0)
        pooled.append(jnp.max(acc, axis=1))
    h_in = jnp.concatenate(pooled, axis=1)
    h = _ref_linear(h_in, params['fc1'][t], relu_out=True)
    h_prev3 = [_ref_linear(h_in, params['fc1'][j], relu_out=True) for j in range(t)]
    h_pre = _ref_linear(h, params['fc2'][t])
    hf_prev2 = []
    if t > 0:
        hf_prev2 = [_ref_linear(h_prev3[j], params['fc2'][j], relu_out=True)
                    for j in range(t)]
        scale = params['Vf1scale'][t - 1][0]
        cat = jnp.concatenate([scale[j] * h_prev3[j] for j in range(t)], axis=1)
        v = _ref_linear(cat, params['Vf1'][t - 1], relu_out=True)
        h_pre = h_pre + _ref_linear(v, params['Uf1'][t - 1])
    y = []
    for tid, _n in taskcla:
        if t > 0 and tid < t:
            out = _ref_linear(hf_prev2[tid], params['last'][tid])
            if tid > 0:
                scl = params['Vflscale'][tid - 1][0]
                cat2 = jnp.concatenate(
                    [scl[j] * hf_prev2[j] for j in range(tid)], axis=1)
                out = out + _ref_linear(
                    _ref_linear(cat2, params['Vfl'][tid - 1]),
                    params['Ufl'][tid - 1])
            y.append(out)
        else:
            y.append(_ref_linear(h_pre, params['last'][tid], relu_in=True))
    return y


# ----------------------------------- main ------------------------------------

if __name__ == "__main__":
    taskcla = [(0, 3), (1, 4), (2, 5)]          # (task id, num classes)
    ntasks = len(taskcla)
    bert_hidden_size = 32                       # args.bert_hidden_size (small)
    expand_factor = 1.117
    sizefc1 = int(expand_factor * bert_hidden_size / ntasks)
    sizefc2 = int(expand_factor * bert_hidden_size / ntasks)
    B, S = 4, 8                                 # batch, sequence (padded to 8 rows inside)
    t = 2                                       # active PNN column

    key = jax.random.PRNGKey(0)
    kparams, kx = jax.random.split(key)
    params = init_params(kparams, taskcla, bert_hidden_size, sizefc1, sizefc2)
    sequence_output = jax.random.normal(kx, (B, S, bert_hidden_size), jnp.float32)

    fused = prepare_fused_inputs(params, t, taskcla, S)
    y = net_forward(sequence_output, fused)
    y = jax.block_until_ready(y)

    with jax.default_matmul_precision('highest'):
        y_ref = net_forward_ref(sequence_output, params, t, taskcla)
        y_ref = jax.block_until_ready(y_ref)

    for out, ref, (tid, n) in zip(y, y_ref, taskcla):
        assert out.shape == (B, n), (out.shape, (B, n))
        assert jnp.allclose(out, ref, rtol=1e-4, atol=1e-4), f"mismatch task {tid}"

    print("KERNEL_OK")
</pallas_src>

<mosaic_0001>
module attributes {stable_mosaic.version = 11 : i64} {
  func.func @_fused_kernel(%arg0: i32, %arg1: memref<8x8x32xf32, #tpu.memory_space<vmem>>, %arg2: memref<784x128xf32, #tpu.memory_space<vmem>>, %arg3: memref<8x128xf32, #tpu.memory_space<vmem>>) attributes {dimension_semantics = [#tpu.dimension_semantics<parallel>], iteration_bounds = array<i64: 1>, scalar_prefetch = 0 : i64, scratch_operands = 0 : i64, tpu.core_type = #tpu.core_type<tc>, window_params = [{transform_indices = @transform_0, window_bounds = array<i64: 8, 8, 32>}, {pipeline_mode = #tpu.pipeline_mode<synchronous>, transform_indices = @transform_1, window_bounds = array<i64: 784, 128>}, {transform_indices = @transform_2, window_bounds = array<i64: 8, 128>}]} {
    %c0 = arith.constant 0 : index
    %c0_0 = arith.constant 0 : index
    %c0_1 = arith.constant 0 : index
    %0 = vector.load %arg1[%c0, %c0_0, %c0_1] : memref<8x8x32xf32, #tpu.memory_space<vmem>>, vector<8x8x32xf32>
    %cst = arith.constant 0.000000e+00 : f32
    %1 = vector.broadcast %cst : f32 to vector<8x2x32xf32>
    %2 = tpu.concatenate %0, %1 in 1 : vector<8x8x32xf32>, vector<8x2x32xf32> -> vector<8x10x32xf32>
    %3 = vector.extract_strided_slice %2 {offsets = [0, 0, 0], sizes = [8, 7, 32], strides = [1, 1, 1]} : vector<8x10x32xf32> to vector<8x7x32xf32>
    %4 = vector.extract_strided_slice %2 {offsets = [0, 1, 0], sizes = [8, 7, 32], strides = [1, 1, 1]} : vector<8x10x32xf32> to vector<8x7x32xf32>
    %5 = vector.extract_strided_slice %2 {offsets = [0, 2, 0], sizes = [8, 7, 32], strides = [1, 1, 1]} : vector<8x10x32xf32> to vector<8x7x32xf32>
    %6 = vector.extract_strided_slice %2 {offsets = [0, 3, 0], sizes = [8, 7, 32], strides = [1, 1, 1]} : vector<8x10x32xf32> to vector<8x7x32xf32>
    %7 = tpu.concatenate %3, %4, %5, %6 in 2 : vector<8x7x32xf32>, vector<8x7x32xf32>, vector<8x7x32xf32>, vector<8x7x32xf32> -> vector<8x7x128xf32>
    %8 = vector.shape_cast %7 : vector<8x7x128xf32> to vector<56x128xf32>
    %c0_2 = arith.constant 0 : index
    %c0_3 = arith.constant 0 : index
    %9 = vector.load %arg2[%c0_2, %c0_3] : memref<784x128xf32, #tpu.memory_space<vmem>>, vector<128x128xf32>
    %c768 = arith.constant 768 : index
    %c0_4 = arith.constant 0 : index
    %10 = vector.load %arg2[%c768, %c0_4] : memref<784x128xf32, #tpu.memory_space<vmem>>, vector<1x128xf32>
    %c774 = arith.constant 774 : index
    %c0_5 = arith.constant 0 : index
    %11 = vector.load %arg2[%c774, %c0_5] : memref<784x128xf32, #tpu.memory_space<vmem>>, vector<7x128xf32>
    %cst_6 = arith.constant dense<0.000000e+00> : vector<56x128xf32>
    %12 = tpu.matmul %8, %9, %cst_6 {dimension_numbers = #tpu.dot_dimension_numbers<[1], [0], [0], [1], [0, 0, 1, 1], [], []>} : vector<56x128xf32>, vector<128x128xf32>, vector<56x128xf32> -> vector<56x128xf32>
    %13 = vector.shape_cast %12 : vector<56x128xf32> to vector<8x7x128xf32>
    %14 = vector.shape_cast %10 : vector<1x128xf32> to vector<1x1x128xf32>
    %15 = vector.broadcast %14 : vector<1x1x128xf32> to vector<8x7x128xf32>
    %16 = arith.addf %13, %15 : vector<8x7x128xf32>
    %cst_7 = arith.constant 0.000000e+00 : f32
    %17 = vector.broadcast %cst_7 : f32 to vector<8x7x128xf32>
    %18 = arith.maximumf %16, %17 : vector<8x7x128xf32>
    %19 = vector.shape_cast %11 : vector<7x128xf32> to vector<1x7x128xf32>
    %20 = vector.broadcast %19 : vector<1x7x128xf32> to vector<8x7x128xf32>
    %21 = arith.mulf %18, %20 : vector<8x7x128xf32>
    %cst_8 = arith.constant dense<0xFF800000> : vector<8x128xf32>
    %22 = vector.multi_reduction <maximumf>, %21, %cst_8 [1] : vector<8x7x128xf32> to vector<8x128xf32>
    %c128 = arith.constant 128 : index
    %c0_9 = arith.constant 0 : index
    %23 = vector.load %arg2[%c128, %c0_9] : memref<784x128xf32, #tpu.memory_space<vmem>>, vector<128x128xf32>
    %c769 = arith.constant 769 : index
    %c0_10 = arith.constant 0 : index
    %24 = vector.load %arg2[%c769, %c0_10] : memref<784x128xf32, #tpu.memory_space<vmem>>, vector<1x128xf32>
    %cst_11 = arith.constant dense<0.000000e+00> : vector<8x128xf32>
    %25 = tpu.matmul %22, %23, %cst_11 {dimension_numbers = #tpu.dot_dimension_numbers<[1], [0], [0], [1], [0, 0, 1, 1], [], []>} : vector<8x128xf32>, vector<128x128xf32>, vector<8x128xf32> -> vector<8x128xf32>
    %26 = vector.broadcast %24 : vector<1x128xf32> to vector<8x128xf32>
    %27 = arith.addf %25, %26 : vector<8x128xf32>
    %cst_12 = arith.constant 0.000000e+00 : f32
    %28 = vector.broadcast %cst_12 : f32 to vector<8x128xf32>
    %29 = arith.maximumf %27, %28 : vector<8x128xf32>
    %c256 = arith.constant 256 : index
    %c0_13 = arith.constant 0 : index
    %30 = vector.load %arg2[%c256, %c0_13] : memref<784x128xf32, #tpu.memory_space<vmem>>, vector<128x128xf32>
    %c770 = arith.constant 770 : index
    %c0_14 = arith.constant 0 : index
    %31 = vector.load %arg2[%c770, %c0_14] : memref<784x128xf32, #tpu.memory_space<vmem>>, vector<1x128xf32>
    %cst_15 = arith.constant dense<0.000000e+00> : vector<8x128xf32>
    %32 = tpu.matmul %29, %30, %cst_15 {dimension_numbers = #tpu.dot_dimension_numbers<[1], [0], [0], [1], [0, 0, 1, 1], [], []>} : vector<8x128xf32>, vector<128x128xf32>, vector<8x128xf32> -> vector<8x128xf32>
    %33 = vector.broadcast %31 : vector<1x128xf32> to vector<8x128xf32>
    %34 = arith.addf %32, %33 : vector<8x128xf32>
    %c384 = arith.constant 384 : index
    %c0_16 = arith.constant 0 : index
    %35 = vector.load %arg2[%c384, %c0_16] : memref<784x128xf32, #tpu.memory_space<vmem>>, vector<128x128xf32>
    %c771 = arith.constant 771 : index
    %c0_17 = arith.constant 0 : index
    %36 = vector.load %arg2[%c771, %c0_17] : memref<784x128xf32, #tpu.memory_space<vmem>>, vector<1x128xf32>
    %cst_18 = arith.constant dense<0.000000e+00> : vector<8x128xf32>
    %37 = tpu.matmul %29, %35, %cst_18 {dimension_numbers = #tpu.dot_dimension_numbers<[1], [0], [0], [1], [0, 0, 1, 1], [], []>} : vector<8x128xf32>, vector<128x128xf32>, vector<8x128xf32> -> vector<8x128xf32>
    %38 = vector.broadcast %36 : vector<1x128xf32> to vector<8x128xf32>
    %39 = arith.addf %37, %38 : vector<8x128xf32>
    %cst_19 = arith.constant 0.000000e+00 : f32
    %40 = vector.broadcast %cst_19 : f32 to vector<8x128xf32>
    %41 = arith.maximumf %39, %40 : vector<8x128xf32>
    %c512 = arith.constant 512 : index
    %c0_20 = arith.constant 0 : index
    %42 = vector.load %arg2[%c512, %c0_20] : memref<784x128xf32, #tpu.memory_space<vmem>>, vector<128x128xf32>
    %c772 = arith.constant 772 : index
    %c0_21 = arith.constant 0 : index
    %43 = vector.load %arg2[%c772, %c0_21] : memref<784x128xf32, #tpu.memory_space<vmem>>, vector<1x128xf32>
    %cst_22 = arith.constant dense<0.000000e+00> : vector<8x128xf32>
    %44 = tpu.matmul %41, %42, %cst_22 {dimension_numbers = #tpu.dot_dimension_numbers<[1], [0], [0], [1], [0, 0, 1, 1], [], []>} : vector<8x128xf32>, vector<128x128xf32>, vector<8x128xf32> -> vector<8x128xf32>
    %45 = arith.addf %34, %44 : vector<8x128xf32>
    %46 = vector.broadcast %43 : vector<1x128xf32> to vector<8x128xf32>
    %47 = arith.addf %45, %46 : vector<8x128xf32>
    %cst_23 = arith.constant 0.000000e+00 : f32
    %48 = vector.broadcast %cst_23 : f32 to vector<8x128xf32>
    %49 = arith.maximumf %47, %48 : vector<8x128xf32>
    %c640 = arith.constant 640 : index
    %c0_24 = arith.constant 0 : index
    %50 = vector.load %arg2[%c640, %c0_24] : memref<784x128xf32, #tpu.memory_space<vmem>>, vector<128x128xf32>
    %c773 = arith.constant 773 : index
    %c0_25 = arith.constant 0 : index
    %51 = vector.load %arg2[%c773, %c0_25] : memref<784x128xf32, #tpu.memory_space<vmem>>, vector<1x128xf32>
    %cst_26 = arith.constant dense<0.000000e+00> : vector<8x128xf32>
    %52 = tpu.matmul %49, %50, %cst_26 {dimension_numbers = #tpu.dot_dimension_numbers<[1], [0], [0], [1], [0, 0, 1, 1], [], []>} : vector<8x128xf32>, vector<128x128xf32>, vector<8x128xf32> -> vector<8x128xf32>
    %53 = vector.broadcast %51 : vector<1x128xf32> to vector<8x128xf32>
    %54 = arith.addf %52, %53 : vector<8x128xf32>
    %c0_27 = arith.constant 0 : index
    %c0_28 = arith.constant 0 : index
    %55 = vector.load %arg3[%c0_27, %c0_28] : memref<8x128xf32, #tpu.memory_space<vmem>>, vector<8x128xf32>
    tpu.vector_store %arg3[%c0_27, %c0_28], %54 {strides = array<i32>} : memref<8x128xf32, #tpu.memory_space<vmem>>, vector<8x128xf32>,
    return
  }
  func.func @transform_0(%arg0: i32) -> (i32, i32, i32) {
    %c0_i32 = arith.constant 0 : i32
    %c0_i32_0 = arith.constant 0 : i32
    %c0_i32_1 = arith.constant 0 : i32
    return %arg0, %c0_i32, %c0_i32_0 : i32, i32, i32
  }
  func.func @transform_1(%arg0: i32) -> (i32, i32) {
    %c0_i32 = arith.constant 0 : i32
    %c0_i32_0 = arith.constant 0 : i32
    %c0_i32_1 = arith.constant 0 : i32
    return %c0_i32, %c0_i32_0 : i32, i32
  }
  func.func @transform_2(%arg0: i32) -> (i32, i32) {
    %c0_i32 = arith.constant 0 : i32
    %c0_i32_0 = arith.constant 0 : i32
    return %arg0, %c0_i32 : i32, i32
  }
}

</mosaic_0001>

<llo_original>
// kernel: tpu_custom_call.1
$region0: #{tpu_custom_call.1}
  #allocation0 [shape = 'u32[]', space=smem, size = 0x4, offset = 0x4, fixed_abs, tag = 'smem constant byte address 0x4 - core index']
  #allocation1 [shape = 'u32[144,128]{1,0:T(1,128)}', space=vmem, size = 0x12000, scoped, tag = 'internal scratch']
  %s0 = inlined_call_operand.hbm [shape: f32[8,8,32], index: 0, kind: input, shape index: {}]
  %s1 = inlined_call_operand.hbm [shape: f32[784,128], index: 1, kind: input, shape index: {}]
  %s2 = inlined_call_operand.hbm [shape: f32[8,128], index: 2, kind: output, shape index: {}]
  %s3 = sld [smem:[#allocation0]]
  $region26: #{tpu_custom_call.1} parent=0
    _
  %s5 = ssub.s32 1, %s3
  %s6 = scalar_select 0, %s5, %s3
  $region1: #{tpu_custom_call.1} parent=0
    #allocation2 [shape = 'u8[32768]{0}', space=vmem, size = 0x8000, scoped, tag = 'input window, operand 0, single buffered']
    #allocation3 [shape = 's32[1]{0}', space=sflag, size = 0x4, scoped, tag = 'scoped memory for tpu_custom_call.1']
    #allocation4 [shape = 's32[1]{0}', space=sflag, size = 0x4, scoped, tag = 'scoped memory for tpu_custom_call.1']
    #allocation5 [shape = 'u8[401408]{0}', space=vmem, size = 0x62000, scoped, tag = 'input window, operand 1, single buffered']
    #allocation6 [shape = 's32[1]{0}', space=sflag, size = 0x4, scoped, tag = 'scoped memory for tpu_custom_call.1']
    #allocation7 [shape = 'u8[4096]{0}', space=vmem, size = 0x1000, scoped, tag = 'output window, operand 0, single buffered']
    %7 = vsyncpa [#allocation3], 0
    %8 = vsyncpa [#allocation6], 0
    %9 = vsyncpa [#allocation4], 0
    // Predicated region
    $region2: #{tpu_custom_call.1} parent=1 // pred_check
      _
    $region3: #{tpu_custom_call.1} parent=1 // pred_check_branch
      %11 = sbr.rel (0) target = $region5
    $region4: #{tpu_custom_call.1} parent=1 // pred_region
      %s13 = ssub.s32 1024, 1024
      %14 = vsyncadd [#allocation3], %s13
      %s15 = sshll.u32 [#allocation2], 4
      %s16 = int_to_ptr.vmem [resolvable:$true] %s15
      %21 = dma.hbm_to_vmem [thread:$0]  %s0, 1024, %s16, [#allocation3], 128, 128, 8
    $region5: #{tpu_custom_call.1} parent=1 // pred_fallthru
      _
    // Predicated region
    $region6: #{tpu_custom_call.1} parent=1 // pred_check
      _
    $region7: #{tpu_custom_call.1} parent=1 // pred_check_branch
      %23 = sbr.rel (0) target = $region9
    $region8: #{tpu_custom_call.1} parent=1 // pred_region
      %s25 = ssub.s32 12544, 12544
      %26 = vsyncadd [#allocation6], %s25
      %s27 = sshll.u32 [#allocation5], 4
      %s28 = int_to_ptr.vmem [resolvable:$true] %s27
      %33 = dma.hbm_to_vmem [thread:$0]  %s1, 12544, %s28, [#allocation6], 128, 128, 8
    $region9: #{tpu_custom_call.1} parent=1 // pred_fallthru
      _
    // Predicated region
    $region10: #{tpu_custom_call.1} parent=1 // pred_check
      _
    $region11: #{tpu_custom_call.1} parent=1 // pred_check_branch
      %35 = sbr.rel (0) target = $region13
    $region12: #{tpu_custom_call.1} parent=1 // pred_region
      %36 = dma.done [#allocation3], 1024
    $region13: #{tpu_custom_call.1} parent=1 // pred_fallthru
      _
    // Predicated region
    $region14: #{tpu_custom_call.1} parent=1 // pred_check
      _
    $region15: #{tpu_custom_call.1} parent=1 // pred_check_branch
      %38 = sbr.rel (0) target = $region17
    $region16: #{tpu_custom_call.1} parent=1 // pred_region
      %39 = dma.done [#allocation6], 12544
    $region17: #{tpu_custom_call.1} parent=1 // pred_fallthru
      _
    %v40 = vld [vmem:[#allocation2] sm:$0xff]
    %v41 = vld [vmem:[#allocation2 + $0x8] sm:$0xff]
    %v42 = vld [vmem:[#allocation2 + $0x10] sm:$0xff]
    %v43 = vld [vmem:[#allocation2 + $0x18] sm:$0xff]
    %v44 = vld [vmem:[#allocation2 + $0x20] sm:$0xff]
    %v45 = vld [vmem:[#allocation2 + $0x28] sm:$0xff]
    %v46 = vld [vmem:[#allocation2 + $0x30] sm:$0xff]
    %v47 = vld [vmem:[#allocation2 + $0x38] sm:$0xff]
    %v56 = vrot.slane %v40, 1
    %v57 = vrot.slane %v41, 1
    %v58 = vrot.slane %v42, 1
    %v59 = vrot.slane %v43, 1
    %v60 = vrot.slane %v44, 1
    %v61 = vrot.slane %v45, 1
    %v62 = vrot.slane %v46, 1
    %v63 = vrot.slane %v47, 1
    %64 = vrot.lane.b32.xlu0 %v56, 32
    %v65 = vpop.permute.xlu0 %64
    %66 = vrot.lane.b32.xlu0 %v57, 32
    %v67 = vpop.permute.xlu0 %66
    %68 = vrot.lane.b32.xlu0 %v58, 32
    %v69 = vpop.permute.xlu0 %68
    %70 = vrot.lane.b32.xlu0 %v59, 32
    %v71 = vpop.permute.xlu0 %70
    %72 = vrot.lane.b32.xlu0 %v60, 32
    %v73 = vpop.permute.xlu0 %72
    %74 = vrot.lane.b32.xlu0 %v61, 32
    %v75 = vpop.permute.xlu0 %74
    %76 = vrot.lane.b32.xlu0 %v62, 32
    %v77 = vpop.permute.xlu0 %76
    %78 = vrot.lane.b32.xlu0 %v63, 32
    %v79 = vpop.permute.xlu0 %78
    %vm89 = vcmask 1045504
    %v90 = vrot.slane %v40, 2
    %v91 = vrot.slane 0.0, 2
    %v92 = vsel %vm89, %v90, %v91
    %v93 = vrot.slane %v41, 2
    %v94 = vsel %vm89, %v93, %v91
    %v95 = vrot.slane %v42, 2
    %v96 = vsel %vm89, %v95, %v91
    %v97 = vrot.slane %v43, 2
    %v98 = vsel %vm89, %v97, %v91
    %v99 = vrot.slane %v44, 2
    %v100 = vsel %vm89, %v99, %v91
    %v101 = vrot.slane %v45, 2
    %v102 = vsel %vm89, %v101, %v91
    %v103 = vrot.slane %v46, 2
    %v104 = vsel %vm89, %v103, %v91
    %v105 = vrot.slane %v47, 2
    %v106 = vsel %vm89, %v105, %v91
    %107 = vrot.lane.b32.xlu0 %v92, 64
    %v108 = vpop.permute.xlu0 %107
    %109 = vrot.lane.b32.xlu0 %v94, 64
    %v110 = vpop.permute.xlu0 %109
    %111 = vrot.lane.b32.xlu0 %v96, 64
    %v112 = vpop.permute.xlu0 %111
    %113 = vrot.lane.b32.xlu0 %v98, 64
    %v114 = vpop.permute.xlu0 %113
    %115 = vrot.lane.b32.xlu0 %v100, 64
    %v116 = vpop.permute.xlu0 %115
    %117 = vrot.lane.b32.xlu0 %v102, 64
    %v118 = vpop.permute.xlu0 %117
    %119 = vrot.lane.b32.xlu0 %v104, 64
    %v120 = vpop.permute.xlu0 %119
    %121 = vrot.lane.b32.xlu0 %v106, 64
    %v122 = vpop.permute.xlu0 %121
    %vm131 = vcmask 1044480
    %v132 = vrot.slane %v40, 3
    %v133 = vrot.slane 0.0, 3
    %v134 = vsel %vm131, %v132, %v133
    %v135 = vrot.slane %v41, 3
    %v136 = vsel %vm131, %v135, %v133
    %v137 = vrot.slane %v42, 3
    %v138 = vsel %vm131, %v137, %v133
    %v139 = vrot.slane %v43, 3
    %v140 = vsel %vm131, %v139, %v133
    %v141 = vrot.slane %v44, 3
    %v142 = vsel %vm131, %v141, %v133
    %v143 = vrot.slane %v45, 3
    %v144 = vsel %vm131, %v143, %v133
    %v145 = vrot.slane %v46, 3
    %v146 = vsel %vm131, %v145, %v133
    %v147 = vrot.slane %v47, 3
    %v148 = vsel %vm131, %v147, %v133
    %149 = vrot.lane.b32.xlu0 %v134, 96
    %v150 = vpop.permute.xlu0 %149
    %151 = vrot.lane.b32.xlu0 %v136, 96
    %v152 = vpop.permute.xlu0 %151
    %153 = vrot.lane.b32.xlu0 %v138, 96
    %v154 = vpop.permute.xlu0 %153
    %155 = vrot.lane.b32.xlu0 %v140, 96
    %v156 = vpop.permute.xlu0 %155
    %157 = vrot.lane.b32.xlu0 %v142, 96
    %v158 = vpop.permute.xlu0 %157
    %159 = vrot.lane.b32.xlu0 %v144, 96
    %v160 = vpop.permute.xlu0 %159
    %161 = vrot.lane.b32.xlu0 %v146, 96
    %v162 = vpop.permute.xlu0 %161
    %163 = vrot.lane.b32.xlu0 %v148, 96
    %v164 = vpop.permute.xlu0 %163
    %vm173 = vcmask 261120
    %v174 = vsel %vm173, %v40, %v65
    %v175 = vsel %vm173, %v41, %v67
    %v176 = vsel %vm173, %v42, %v69
    %v177 = vsel %vm173, %v43, %v71
    %v178 = vsel %vm173, %v44, %v73
    %v179 = vsel %vm173, %v45, %v75
    %v180 = vsel %vm173, %v46, %v77
    %v181 = vsel %vm173, %v47, %v79
    %vm182 = vcmask 523264
    %v183 = vsel %vm182, %v174, %v108
    %v184 = vsel %vm182, %v175, %v110
    %v185 = vsel %vm182, %v176, %v112
    %v186 = vsel %vm182, %v177, %v114
    %v187 = vsel %vm182, %v178, %v116
    %v188 = vsel %vm182, %v179, %v118
    %v189 = vsel %vm182, %v180, %v120
    %v190 = vsel %vm182, %v181, %v122
    %vm191 = vcmask 785408
    %v192 = vsel %vm191, %v183, %v150
    %v193 = vsel %vm191, %v184, %v152
    %v194 = vsel %vm191, %v185, %v154
    %v195 = vsel %vm191, %v186, %v156
    %v196 = vsel %vm191, %v187, %v158
    %v197 = vsel %vm191, %v188, %v160
    %v198 = vsel %vm191, %v189, %v162
    %v199 = vsel %vm191, %v190, %v164
    %v208 = vcombine.high %v192, %v192
    %v210 = vunpack.c.l.s4 1966171168
    %v211 = vunpack.c.0.s8 %v210
    %v212 = vlaneseq
    %v213 = vshrl.u32 %v212, 7
    %v214 = vsub.s32 %v211, %v213
    %v215 = vrot.slane %v192, %v214
    %v217 = vunpack.c.l.s4 1966171168
    %v218 = vunpack.c.0.s8 %v217
    %v219 = vlaneseq
    %v220 = vshrl.u32 %v219, 7
    %v221 = vsub.s32 %v218, %v220
    %v222 = vrot.slane %v208, %v221
    %v223 = vcombine.high %v215, %v215
    %v224 = vcombine.high %v222, %v222
    %v226 = vunpack.c.l.s4 1966171168
    %v227 = vunpack.c.0.s8 %v226
    %v228 = vlaneseq
    %v229 = vshrl.u32 %v228, 7
    %v230 = vsub.s32 %v227, %v229
    %v231 = vrot.slane %v215, %v230
    %v233 = vunpack.c.l.s4 1966171168
    %v234 = vunpack.c.0.s8 %v233
    %v235 = vlaneseq
    %v236 = vshrl.u32 %v235, 7
    %v237 = vsub.s32 %v234, %v236
    %v238 = vrot.slane %v222, %v237
    %v240 = vunpack.c.l.s4 1966171168
    %v241 = vunpack.c.0.s8 %v240
    %v242 = vlaneseq
    %v243 = vshrl.u32 %v242, 7
    %v244 = vsub.s32 %v241, %v243
    %v245 = vrot.slane %v223, %v244
    %v247 = vunpack.c.l.s4 1966171168
    %v248 = vunpack.c.0.s8 %v247
    %v249 = vlaneseq
    %v250 = vshrl.u32 %v249, 7
    %v251 = vsub.s32 %v248, %v250
    %v252 = vrot.slane %v224, %v251
    %v253 = vcombine.high %v231, %v231
    %v254 = vcombine.high %v238, %v238
    %v255 = vcombine.high %v245, %v245
    %v256 = vcombine.high %v193, %v193
    %v258 = vunpack.c.l.s4 1966171168
    %v259 = vunpack.c.0.s8 %v258
    %v260 = vlaneseq
    %v261 = vshrl.u32 %v260, 7
    %v262 = vsub.s32 %v259, %v261
    %v263 = vrot.slane %v193, %v262
    %v265 = vunpack.c.l.s4 1966171168
    %v266 = vunpack.c.0.s8 %v265
    %v267 = vlaneseq
    %v268 = vshrl.u32 %v267, 7
    %v269 = vsub.s32 %v266, %v268
    %v270 = vrot.slane %v256, %v269
    %v271 = vcombine.high %v263, %v263
    %v272 = vcombine.high %v270, %v270
    %v274 = vunpack.c.l.s4 1966171168
    %v275 = vunpack.c.0.s8 %v274
    %v276 = vlaneseq
    %v277 = vshrl.u32 %v276, 7
    %v278 = vsub.s32 %v275, %v277
    %v279 = vrot.slane %v263, %v278
    %v281 = vunpack.c.l.s4 1966171168
    %v282 = vunpack.c.0.s8 %v281
    %v283 = vlaneseq
    %v284 = vshrl.u32 %v283, 7
    %v285 = vsub.s32 %v282, %v284
    %v286 = vrot.slane %v270, %v285
    %v288 = vunpack.c.l.s4 1966171168
    %v289 = vunpack.c.0.s8 %v288
    %v290 = vlaneseq
    %v291 = vshrl.u32 %v290, 7
    %v292 = vsub.s32 %v289, %v291
    %v293 = vrot.slane %v271, %v292
    %v295 = vunpack.c.l.s4 1966171168
    %v296 = vunpack.c.0.s8 %v295
    %v297 = vlaneseq
    %v298 = vshrl.u32 %v297, 7
    %v299 = vsub.s32 %v296, %v298
    %v300 = vrot.slane %v272, %v299
    %v301 = vcombine.high %v279, %v279
    %v302 = vcombine.high %v286, %v286
    %v303 = vcombine.high %v293, %v293
    %v304 = vcombine.high %v194, %v194
    %v306 = vunpack.c.l.s4 1966171168
    %v307 = vunpack.c.0.s8 %v306
    %v308 = vlaneseq
    %v309 = vshrl.u32 %v308, 7
    %v310 = vsub.s32 %v307, %v309
    %v311 = vrot.slane %v194, %v310
    %v313 = vunpack.c.l.s4 1966171168
    %v314 = vunpack.c.0.s8 %v313
    %v315 = vlaneseq
    %v316 = vshrl.u32 %v315, 7
    %v317 = vsub.s32 %v314, %v316
    %v318 = vrot.slane %v304, %v317
    %v319 = vcombine.high %v311, %v311
    %v320 = vcombine.high %v318, %v318
    %v322 = vunpack.c.l.s4 1966171168
    %v323 = vunpack.c.0.s8 %v322
    %v324 = vlaneseq
    %v325 = vshrl.u32 %v324, 7
    %v326 = vsub.s32 %v323, %v325
    %v327 = vrot.slane %v311, %v326
    %v329 = vunpack.c.l.s4 1966171168
    %v330 = vunpack.c.0.s8 %v329
    %v331 = vlaneseq
    %v332 = vshrl.u32 %v331, 7
    %v333 = vsub.s32 %v330, %v332
    %v334 = vrot.slane %v318, %v333
    %v336 = vunpack.c.l.s4 1966171168
    %v337 = vunpack.c.0.s8 %v336
    %v338 = vlaneseq
    %v339 = vshrl.u32 %v338, 7
    %v340 = vsub.s32 %v337, %v339
    %v341 = vrot.slane %v319, %v340
    %v343 = vunpack.c.l.s4 1966171168
    %v344 = vunpack.c.0.s8 %v343
    %v345 = vlaneseq
    %v346 = vshrl.u32 %v345, 7
    %v347 = vsub.s32 %v344, %v346
    %v348 = vrot.slane %v320, %v347
    %v349 = vcombine.high %v327, %v327
    %v350 = vcombine.high %v334, %v334
    %v351 = vcombine.high %v341, %v341
    %v352 = vcombine.high %v195, %v195
    %v354 = vunpack.c.l.s4 1966171168
    %v355 = vunpack.c.0.s8 %v354
    %v356 = vlaneseq
    %v357 = vshrl.u32 %v356, 7
    %v358 = vsub.s32 %v355, %v357
    %v359 = vrot.slane %v195, %v358
    %v361 = vunpack.c.l.s4 1966171168
    %v362 = vunpack.c.0.s8 %v361
    %v363 = vlaneseq
    %v364 = vshrl.u32 %v363, 7
    %v365 = vsub.s32 %v362, %v364
    %v366 = vrot.slane %v352, %v365
    %v367 = vcombine.high %v359, %v359
    %v368 = vcombine.high %v366, %v366
    %v370 = vunpack.c.l.s4 1966171168
    %v371 = vunpack.c.0.s8 %v370
    %v372 = vlaneseq
    %v373 = vshrl.u32 %v372, 7
    %v374 = vsub.s32 %v371, %v373
    %v375 = vrot.slane %v359, %v374
    %v377 = vunpack.c.l.s4 1966171168
    %v378 = vunpack.c.0.s8 %v377
    %v379 = vlaneseq
    %v380 = vshrl.u32 %v379, 7
    %v381 = vsub.s32 %v378, %v380
    %v382 = vrot.slane %v366, %v381
    %v384 = vunpack.c.l.s4 1966171168
    %v385 = vunpack.c.0.s8 %v384
    %v386 = vlaneseq
    %v387 = vshrl.u32 %v386, 7
    %v388 = vsub.s32 %v385, %v387
    %v389 = vrot.slane %v367, %v388
    %v391 = vunpack.c.l.s4 1966171168
    %v392 = vunpack.c.0.s8 %v391
    %v393 = vlaneseq
    %v394 = vshrl.u32 %v393, 7
    %v395 = vsub.s32 %v392, %v394
    %v396 = vrot.slane %v368, %v395
    %v397 = vcombine.high %v375, %v375
    %v398 = vcombine.high %v382, %v382
    %v399 = vcombine.high %v389, %v389
    %v400 = vcombine.high %v196, %v196
    %v402 = vunpack.c.l.s4 1966171168
    %v403 = vunpack.c.0.s8 %v402
    %v404 = vlaneseq
    %v405 = vshrl.u32 %v404, 7
    %v406 = vsub.s32 %v403, %v405
    %v407 = vrot.slane %v196, %v406
    %v409 = vunpack.c.l.s4 1966171168
    %v410 = vunpack.c.0.s8 %v409
    %v411 = vlaneseq
    %v412 = vshrl.u32 %v411, 7
    %v413 = vsub.s32 %v410, %v412
    %v414 = vrot.slane %v400, %v413
    %v415 = vcombine.high %v407, %v407
    %v416 = vcombine.high %v414, %v414
    %v418 = vunpack.c.l.s4 1966171168
    %v419 = vunpack.c.0.s8 %v418
    %v420 = vlaneseq
    %v421 = vshrl.u32 %v420, 7
    %v422 = vsub.s32 %v419, %v421
    %v423 = vrot.slane %v407, %v422
    %v425 = vunpack.c.l.s4 1966171168
    %v426 = vunpack.c.0.s8 %v425
    %v427 = vlaneseq
    %v428 = vshrl.u32 %v427, 7
    %v429 = vsub.s32 %v426, %v428
    %v430 = vrot.slane %v414, %v429
    %v432 = vunpack.c.l.s4 1966171168
    %v433 = vunpack.c.0.s8 %v432
    %v434 = vlaneseq
    %v435 = vshrl.u32 %v434, 7
    %v436 = vsub.s32 %v433, %v435
    %v437 = vrot.slane %v415, %v436
    %v439 = vunpack.c.l.s4 1966171168
    %v440 = vunpack.c.0.s8 %v439
    %v441 = vlaneseq
    %v442 = vshrl.u32 %v441, 7
    %v443 = vsub.s32 %v440, %v442
    %v444 = vrot.slane %v416, %v443
    %v445 = vcombine.high %v423, %v423
    %v446 = vcombine.high %v430, %v430
    %v447 = vcombine.high %v437, %v437
    %v448 = vcombine.high %v197, %v197
    %v450 = vunpack.c.l.s4 1966171168
    %v451 = vunpack.c.0.s8 %v450
    %v452 = vlaneseq
    %v453 = vshrl.u32 %v452, 7
    %v454 = vsub.s32 %v451, %v453
    %v455 = vrot.slane %v197, %v454
    %v457 = vunpack.c.l.s4 1966171168
    %v458 = vunpack.c.0.s8 %v457
    %v459 = vlaneseq
    %v460 = vshrl.u32 %v459, 7
    %v461 = vsub.s32 %v458, %v460
    %v462 = vrot.slane %v448, %v461
    %v463 = vcombine.high %v455, %v455
    %v464 = vcombine.high %v462, %v462
    %v466 = vunpack.c.l.s4 1966171168
    %v467 = vunpack.c.0.s8 %v466
    %v468 = vlaneseq
    %v469 = vshrl.u32 %v468, 7
    %v470 = vsub.s32 %v467, %v469
    %v471 = vrot.slane %v455, %v470
    %v473 = vunpack.c.l.s4 1966171168
    %v474 = vunpack.c.0.s8 %v473
    %v475 = vlaneseq
    %v476 = vshrl.u32 %v475, 7
    %v477 = vsub.s32 %v474, %v476
    %v478 = vrot.slane %v462, %v477
    %v480 = vunpack.c.l.s4 1966171168
    %v481 = vunpack.c.0.s8 %v480
    %v482 = vlaneseq
    %v483 = vshrl.u32 %v482, 7
    %v484 = vsub.s32 %v481, %v483
    %v485 = vrot.slane %v463, %v484
    %v487 = vunpack.c.l.s4 1966171168
    %v488 = vunpack.c.0.s8 %v487
    %v489 = vlaneseq
    %v490 = vshrl.u32 %v489, 7
    %v491 = vsub.s32 %v488, %v490
    %v492 = vrot.slane %v464, %v491
    %v493 = vcombine.high %v471, %v471
    %v494 = vcombine.high %v478, %v478
    %v495 = vcombine.high %v485, %v485
    %v496 = vcombine.high %v198, %v198
    %v498 = vunpack.c.l.s4 1966171168
    %v499 = vunpack.c.0.s8 %v498
    %v500 = vlaneseq
    %v501 = vshrl.u32 %v500, 7
    %v502 = vsub.s32 %v499, %v501
    %v503 = vrot.slane %v198, %v502
    %v505 = vunpack.c.l.s4 1966171168
    %v506 = vunpack.c.0.s8 %v505
    %v507 = vlaneseq
    %v508 = vshrl.u32 %v507, 7
    %v509 = vsub.s32 %v506, %v508
    %v510 = vrot.slane %v496, %v509
    %v511 = vcombine.high %v503, %v503
    %v512 = vcombine.high %v510, %v510
    %v514 = vunpack.c.l.s4 1966171168
    %v515 = vunpack.c.0.s8 %v514
    %v516 = vlaneseq
    %v517 = vshrl.u32 %v516, 7
    %v518 = vsub.s32 %v515, %v517
    %v519 = vrot.slane %v503, %v518
    %v521 = vunpack.c.l.s4 1966171168
    %v522 = vunpack.c.0.s8 %v521
    %v523 = vlaneseq
    %v524 = vshrl.u32 %v523, 7
    %v525 = vsub.s32 %v522, %v524
    %v526 = vrot.slane %v510, %v525
    %v528 = vunpack.c.l.s4 1966171168
    %v529 = vunpack.c.0.s8 %v528
    %v530 = vlaneseq
    %v531 = vshrl.u32 %v530, 7
    %v532 = vsub.s32 %v529, %v531
    %v533 = vrot.slane %v511, %v532
    %v535 = vunpack.c.l.s4 1966171168
    %v536 = vunpack.c.0.s8 %v535
    %v537 = vlaneseq
    %v538 = vshrl.u32 %v537, 7
    %v539 = vsub.s32 %v536, %v538
    %v540 = vrot.slane %v512, %v539
    %v541 = vcombine.high %v519, %v519
    %v542 = vcombine.high %v526, %v526
    %v543 = vcombine.high %v533, %v533
    %v544 = vcombine.high %v199, %v199
    %v546 = vunpack.c.l.s4 1966171168
    %v547 = vunpack.c.0.s8 %v546
    %v548 = vlaneseq
    %v549 = vshrl.u32 %v548, 7
    %v550 = vsub.s32 %v547, %v549
    %v551 = vrot.slane %v199, %v550
    %v553 = vunpack.c.l.s4 1966171168
    %v554 = vunpack.c.0.s8 %v553
    %v555 = vlaneseq
    %v556 = vshrl.u32 %v555, 7
    %v557 = vsub.s32 %v554, %v556
    %v558 = vrot.slane %v544, %v557
    %v559 = vcombine.high %v551, %v551
    %v560 = vcombine.high %v558, %v558
    %v562 = vunpack.c.l.s4 1966171168
    %v563 = vunpack.c.0.s8 %v562
    %v564 = vlaneseq
    %v565 = vshrl.u32 %v564, 7
    %v566 = vsub.s32 %v563, %v565
    %v567 = vrot.slane %v551, %v566
    %v569 = vunpack.c.l.s4 1966171168
    %v570 = vunpack.c.0.s8 %v569
    %v571 = vlaneseq
    %v572 = vshrl.u32 %v571, 7
    %v573 = vsub.s32 %v570, %v572
    %v574 = vrot.slane %v558, %v573
    %v576 = vunpack.c.l.s4 1966171168
    %v577 = vunpack.c.0.s8 %v576
    %v578 = vlaneseq
    %v579 = vshrl.u32 %v578, 7
    %v580 = vsub.s32 %v577, %v579
    %v581 = vrot.slane %v559, %v580
    %v583 = vunpack.c.l.s4 1966171168
    %v584 = vunpack.c.0.s8 %v583
    %v585 = vlaneseq
    %v586 = vshrl.u32 %v585, 7
    %v587 = vsub.s32 %v584, %v586
    %v588 = vrot.slane %v560, %v587
    %v589 = vcombine.high %v567, %v567
    %v590 = vcombine.high %v574, %v574
    %v591 = vcombine.high %v581, %v581
    %v592 = vld [vmem:[#allocation5] sm:$0xff]
    %v593 = vld [vmem:[#allocation5 + $0x8] sm:$0xff]
    %v594 = vld [vmem:[#allocation5 + $0x10] sm:$0xff]
    %v595 = vld [vmem:[#allocation5 + $0x18] sm:$0xff]
    %v596 = vld [vmem:[#allocation5 + $0x20] sm:$0xff]
    %v597 = vld [vmem:[#allocation5 + $0x28] sm:$0xff]
    %v598 = vld [vmem:[#allocation5 + $0x30] sm:$0xff]
    %v599 = vld [vmem:[#allocation5 + $0x38] sm:$0xff]
    %v600 = vld [vmem:[#allocation5 + $0x40] sm:$0xff]
    %v601 = vld [vmem:[#allocation5 + $0x48] sm:$0xff]
    %v602 = vld [vmem:[#allocation5 + $0x50] sm:$0xff]
    %v603 = vld [vmem:[#allocation5 + $0x58] sm:$0xff]
    %v604 = vld [vmem:[#allocation5 + $0x60] sm:$0xff]
    %v605 = vld [vmem:[#allocation5 + $0x68] sm:$0xff]
    %v606 = vld [vmem:[#allocation5 + $0x70] sm:$0xff]
    %v607 = vld [vmem:[#allocation5 + $0x78] sm:$0xff]
    %v608 = vld [vmem:[#allocation5 + $0x300] sm:$0x1]
    %v609 = vld [vmem:[#allocation5 + $0x306] sm:$0x7f]
    %v610 = vcombine.low %v231, %v245
    %v611 = vcombine.low %v253, %v255
    %v612 = vcombine.low %v238, %v252
    %v613 = vcombine.low %v254, %v279
    %v615 = vunpack.c.l.s4 1966171168
    %v616 = vunpack.c.0.s8 %v615
    %v617 = vlaneseq
    %v618 = vshrl.u32 %v617, 7
    %v619 = vsub.s32 %v616, %v618
    %v620 = vrot.slane %v610, %v619
    %v622 = vunpack.c.l.s4 1966171168
    %v623 = vunpack.c.0.s8 %v622
    %v624 = vlaneseq
    %v625 = vshrl.u32 %v624, 7
    %v626 = vsub.s32 %v623, %v625
    %v627 = vrot.slane %v611, %v626
    %v629 = vunpack.c.l.s4 1966171168
    %v630 = vunpack.c.0.s8 %v629
    %v631 = vlaneseq
    %v632 = vshrl.u32 %v631, 7
    %v633 = vsub.s32 %v630, %v632
    %v634 = vrot.slane %v612, %v633
    %v636 = vunpack.c.l.s4 1966171168
    %v637 = vunpack.c.0.s8 %v636
    %v638 = vlaneseq
    %v639 = vshrl.u32 %v638, 7
    %v640 = vsub.s32 %v637, %v639
    %v641 = vrot.slane %v613, %v640
    %v642 = vcombine.low %v620, %v627
    %v643 = vcombine.low %v634, %v641
    %v645 = vunpack.c.l.s4 1966171168
    %v646 = vunpack.c.0.s8 %v645
    %v647 = vlaneseq
    %v648 = vshrl.u32 %v647, 7
    %v649 = vsub.s32 %v646, %v648
    %v650 = vrot.slane %v642, %v649
    %v652 = vunpack.c.l.s4 1966171168
    %v653 = vunpack.c.0.s8 %v652
    %v654 = vlaneseq
    %v655 = vshrl.u32 %v654, 7
    %v656 = vsub.s32 %v653, %v655
    %v657 = vrot.slane %v643, %v656
    %v658 = vcombine.low %v650, %v657
    %v659 = vcombine.low %v293, %v301
    %v660 = vcombine.low %v303, %v286
    %v661 = vcombine.low %v300, %v302
    %v662 = vcombine.low %v327, %v341
    %v664 = vunpack.c.l.s4 1966171168
    %v665 = vunpack.c.0.s8 %v664
    %v666 = vlaneseq
    %v667 = vshrl.u32 %v666, 7
    %v668 = vsub.s32 %v665, %v667
    %v669 = vrot.slane %v659, %v668
    %v671 = vunpack.c.l.s4 1966171168
    %v672 = vunpack.c.0.s8 %v671
    %v673 = vlaneseq
    %v674 = vshrl.u32 %v673, 7
    %v675 = vsub.s32 %v672, %v674
    %v676 = vrot.slane %v660, %v675
    %v678 = vunpack.c.l.s4 1966171168
    %v679 = vunpack.c.0.s8 %v678
    %v680 = vlaneseq
    %v681 = vshrl.u32 %v680, 7
    %v682 = vsub.s32 %v679, %v681
    %v683 = vrot.slane %v661, %v682
    %v685 = vunpack.c.l.s4 1966171168
    %v686 = vunpack.c.0.s8 %v685
    %v687 = vlaneseq
    %v688 = vshrl.u32 %v687, 7
    %v689 = vsub.s32 %v686, %v688
    %v690 = vrot.slane %v662, %v689
    %v691 = vcombine.low %v669, %v676
    %v692 = vcombine.low %v683, %v690
    %v694 = vunpack.c.l.s4 1966171168
    %v695 = vunpack.c.0.s8 %v694
    %v696 = vlaneseq
    %v697 = vshrl.u32 %v696, 7
    %v698 = vsub.s32 %v695, %v697
    %v699 = vrot.slane %v691, %v698
    %v701 = vunpack.c.l.s4 1966171168
    %v702 = vunpack.c.0.s8 %v701
    %v703 = vlaneseq
    %v704 = vshrl.u32 %v703, 7
    %v705 = vsub.s32 %v702, %v704
    %v706 = vrot.slane %v692, %v705
    %v707 = vcombine.low %v699, %v706
    %v708 = vcombine.low %v349, %v351
    %v709 = vcombine.low %v334, %v348
    %v710 = vcombine.low %v350, %v375
    %v711 = vcombine.low %v389, %v397
    %v713 = vunpack.c.l.s4 1966171168
    %v714 = vunpack.c.0.s8 %v713
    %v715 = vlaneseq
    %v716 = vshrl.u32 %v715, 7
    %v717 = vsub.s32 %v714, %v716
    %v718 = vrot.slane %v708, %v717
    %v720 = vunpack.c.l.s4 1966171168
    %v721 = vunpack.c.0.s8 %v720
    %v722 = vlaneseq
    %v723 = vshrl.u32 %v722, 7
    %v724 = vsub.s32 %v721, %v723
    %v725 = vrot.slane %v709, %v724
    %v727 = vunpack.c.l.s4 1966171168
    %v728 = vunpack.c.0.s8 %v727
    %v729 = vlaneseq
    %v730 = vshrl.u32 %v729, 7
    %v731 = vsub.s32 %v728, %v730
    %v732 = vrot.slane %v710, %v731
    %v734 = vunpack.c.l.s4 1966171168
    %v735 = vunpack.c.0.s8 %v734
    %v736 = vlaneseq
    %v737 = vshrl.u32 %v736, 7
    %v738 = vsub.s32 %v735, %v737
    %v739 = vrot.slane %v711, %v738
    %v740 = vcombine.low %v718, %v725
    %v741 = vcombine.low %v732, %v739
    %v743 = vunpack.c.l.s4 1966171168
    %v744 = vunpack.c.0.s8 %v743
    %v745 = vlaneseq
    %v746 = vshrl.u32 %v745, 7
    %v747 = vsub.s32 %v744, %v746
    %v748 = vrot.slane %v740, %v747
    %v750 = vunpack.c.l.s4 1966171168
    %v751 = vunpack.c.0.s8 %v750
    %v752 = vlaneseq
    %v753 = vshrl.u32 %v752, 7
    %v754 = vsub.s32 %v751, %v753
    %v755 = vrot.slane %v741, %v754
    %v756 = vcombine.low %v748, %v755
    %v757 = vcombine.low %v399, %v382
    %v758 = vcombine.low %v396, %v398
    %v759 = vcombine.low %v423, %v437
    %v760 = vcombine.low %v445, %v447
    %v762 = vunpack.c.l.s4 1966171168
    %v763 = vunpack.c.0.s8 %v762
    %v764 = vlaneseq
    %v765 = vshrl.u32 %v764, 7
    %v766 = vsub.s32 %v763, %v765
    %v767 = vrot.slane %v757, %v766
    %v769 = vunpack.c.l.s4 1966171168
    %v770 = vunpack.c.0.s8 %v769
    %v771 = vlaneseq
    %v772 = vshrl.u32 %v771, 7
    %v773 = vsub.s32 %v770, %v772
    %v774 = vrot.slane %v758, %v773
    %v776 = vunpack.c.l.s4 1966171168
    %v777 = vunpack.c.0.s8 %v776
    %v778 = vlaneseq
    %v779 = vshrl.u32 %v778, 7
    %v780 = vsub.s32 %v777, %v779
    %v781 = vrot.slane %v759, %v780
    %v783 = vunpack.c.l.s4 1966171168
    %v784 = vunpack.c.0.s8 %v783
    %v785 = vlaneseq
    %v786 = vshrl.u32 %v785, 7
    %v787 = vsub.s32 %v784, %v786
    %v788 = vrot.slane %v760, %v787
    %v789 = vcombine.low %v767, %v774
    %v790 = vcombine.low %v781, %v788
    %v792 = vunpack.c.l.s4 1966171168
    %v793 = vunpack.c.0.s8 %v792
    %v794 = vlaneseq
    %v795 = vshrl.u32 %v794, 7
    %v796 = vsub.s32 %v793, %v795
    %v797 = vrot.slane %v789, %v796
    %v799 = vunpack.c.l.s4 1966171168
    %v800 = vunpack.c.0.s8 %v799
    %v801 = vlaneseq
    %v802 = vshrl.u32 %v801, 7
    %v803 = vsub.s32 %v800, %v802
    %v804 = vrot.slane %v790, %v803
    %v805 = vcombine.low %v797, %v804
    %v806 = vcombine.low %v430, %v444
    %v807 = vcombine.low %v446, %v471
    %v808 = vcombine.low %v485, %v493
    %v809 = vcombine.low %v495, %v478
    %v811 = vunpack.c.l.s4 1966171168
    %v812 = vunpack.c.0.s8 %v811
    %v813 = vlaneseq
    %v814 = vshrl.u32 %v813, 7
    %v815 = vsub.s32 %v812, %v814
    %v816 = vrot.slane %v806, %v815
    %v818 = vunpack.c.l.s4 1966171168
    %v819 = vunpack.c.0.s8 %v818
    %v820 = vlaneseq
    %v821 = vshrl.u32 %v820, 7
    %v822 = vsub.s32 %v819, %v821
    %v823 = vrot.slane %v807, %v822
    %v825 = vunpack.c.l.s4 1966171168
    %v826 = vunpack.c.0.s8 %v825
    %v827 = vlaneseq
    %v828 = vshrl.u32 %v827, 7
    %v829 = vsub.s32 %v826, %v828
    %v830 = vrot.slane %v808, %v829
    %v832 = vunpack.c.l.s4 1966171168
    %v833 = vunpack.c.0.s8 %v832
    %v834 = vlaneseq
    %v835 = vshrl.u32 %v834, 7
    %v836 = vsub.s32 %v833, %v835
    %v837 = vrot.slane %v809, %v836
    %v838 = vcombine.low %v816, %v823
    %v839 = vcombine.low %v830, %v837
    %v841 = vunpack.c.l.s4 1966171168
    %v842 = vunpack.c.0.s8 %v841
    %v843 = vlaneseq
    %v844 = vshrl.u32 %v843, 7
    %v845 = vsub.s32 %v842, %v844
    %v846 = vrot.slane %v838, %v845
    %v848 = vunpack.c.l.s4 1966171168
    %v849 = vunpack.c.0.s8 %v848
    %v850 = vlaneseq
    %v851 = vshrl.u32 %v850, 7
    %v852 = vsub.s32 %v849, %v851
    %v853 = vrot.slane %v839, %v852
    %v854 = vcombine.low %v846, %v853
    %v855 = vcombine.low %v492, %v494
    %v856 = vcombine.low %v519, %v533
    %v857 = vcombine.low %v541, %v543
    %v858 = vcombine.low %v526, %v540
    %v860 = vunpack.c.l.s4 1966171168
    %v861 = vunpack.c.0.s8 %v860
    %v862 = vlaneseq
    %v863 = vshrl.u32 %v862, 7
    %v864 = vsub.s32 %v861, %v863
    %v865 = vrot.slane %v855, %v864
    %v867 = vunpack.c.l.s4 1966171168
    %v868 = vunpack.c.0.s8 %v867
    %v869 = vlaneseq
    %v870 = vshrl.u32 %v869, 7
    %v871 = vsub.s32 %v868, %v870
    %v872 = vrot.slane %v856, %v871
    %v874 = vunpack.c.l.s4 1966171168
    %v875 = vunpack.c.0.s8 %v874
    %v876 = vlaneseq
    %v877 = vshrl.u32 %v876, 7
    %v878 = vsub.s32 %v875, %v877
    %v879 = vrot.slane %v857, %v878
    %v881 = vunpack.c.l.s4 1966171168
    %v882 = vunpack.c.0.s8 %v881
    %v883 = vlaneseq
    %v884 = vshrl.u32 %v883, 7
    %v885 = vsub.s32 %v882, %v884
    %v886 = vrot.slane %v858, %v885
    %v887 = vcombine.low %v865, %v872
    %v888 = vcombine.low %v879, %v886
    %v890 = vunpack.c.l.s4 1966171168
    %v891 = vunpack.c.0.s8 %v890
    %v892 = vlaneseq
    %v893 = vshrl.u32 %v892, 7
    %v894 = vsub.s32 %v891, %v893
    %v895 = vrot.slane %v887, %v894
    %v897 = vunpack.c.l.s4 1966171168
    %v898 = vunpack.c.0.s8 %v897
    %v899 = vlaneseq
    %v900 = vshrl.u32 %v899, 7
    %v901 = vsub.s32 %v898, %v900
    %v902 = vrot.slane %v888, %v901
    %v903 = vcombine.low %v895, %v902
    %v904 = vcombine.low %v542, %v567
    %v905 = vcombine.low %v581, %v589
    %v906 = vcombine.low %v591, %v574
    %v907 = vcombine.low %v588, %v590
    %v909 = vunpack.c.l.s4 1966171168
    %v910 = vunpack.c.0.s8 %v909
    %v911 = vlaneseq
    %v912 = vshrl.u32 %v911, 7
    %v913 = vsub.s32 %v910, %v912
    %v914 = vrot.slane %v904, %v913
    %v916 = vunpack.c.l.s4 1966171168
    %v917 = vunpack.c.0.s8 %v916
    %v918 = vlaneseq
    %v919 = vshrl.u32 %v918, 7
    %v920 = vsub.s32 %v917, %v919
    %v921 = vrot.slane %v905, %v920
    %v923 = vunpack.c.l.s4 1966171168
    %v924 = vunpack.c.0.s8 %v923
    %v925 = vlaneseq
    %v926 = vshrl.u32 %v925, 7
    %v927 = vsub.s32 %v924, %v926
    %v928 = vrot.slane %v906, %v927
    %v930 = vunpack.c.l.s4 1966171168
    %v931 = vunpack.c.0.s8 %v930
    %v932 = vlaneseq
    %v933 = vshrl.u32 %v932, 7
    %v934 = vsub.s32 %v931, %v933
    %v935 = vrot.slane %v907, %v934
    %v936 = vcombine.low %v914, %v921
    %v937 = vcombine.low %v928, %v935
    %v939 = vunpack.c.l.s4 1966171168
    %v940 = vunpack.c.0.s8 %v939
    %v941 = vlaneseq
    %v942 = vshrl.u32 %v941, 7
    %v943 = vsub.s32 %v940, %v942
    %v944 = vrot.slane %v936, %v943
    %v946 = vunpack.c.l.s4 1966171168
    %v947 = vunpack.c.0.s8 %v946
    %v948 = vlaneseq
    %v949 = vshrl.u32 %v948, 7
    %v950 = vsub.s32 %v947, %v949
    %v951 = vrot.slane %v937, %v950
    %v952 = vcombine.low %v944, %v951
    %960 = vmatprep.subr.mxu0 0.0
    %961 = vmatpush1.msra.mxu0 %v607
    %962 = vmatprep.subr.mxu0 0.0
    %963 = vmatpush1.msra.mxu0 %v606
    %964 = vmatprep.subr.mxu0 0.0
    %965 = vmatpush1.msra.mxu0 %v605
    %966 = vmatprep.subr.mxu0 0.0
    %967 = vmatpush1.msra.mxu0 %v604
    %968 = vmatprep.subr.mxu0 0.0
    %969 = vmatpush1.msra.mxu0 %v603
    %970 = vmatprep.subr.mxu0 0.0
    %971 = vmatpush1.msra.mxu0 %v602
    %972 = vmatprep.subr.mxu0 0.0
    %973 = vmatpush1.msra.mxu0 %v601
    %974 = vmatprep.subr.mxu0 0.0
    %975 = vmatpush1.msra.mxu0 %v600
    %976 = vmatprep.subr.mxu0 0.0
    %977 = vmatpush1.msra.mxu0 %v599
    %978 = vmatprep.subr.mxu0 0.0
    %979 = vmatpush1.msra.mxu0 %v598
    %980 = vmatprep.subr.mxu0 0.0
    %981 = vmatpush1.msra.mxu0 %v597
    %982 = vmatprep.subr.mxu0 0.0
    %983 = vmatpush1.msra.mxu0 %v596
    %984 = vmatprep.subr.mxu0 0.0
    %985 = vmatpush1.msra.mxu0 %v595
    %986 = vmatprep.subr.mxu0 0.0
    %987 = vmatpush1.msra.mxu0 %v594
    %988 = vmatprep.subr.mxu0 0.0
    %989 = vmatpush1.msra.mxu0 %v593
    %990 = vmatprep.subr.mxu0 0.0
    %991 = vmatpush1.msra.mxu0 %v592
    %992 = vmatprep.subr.mxu0 0.0
    %993 = vmatpush2.msra.mxu0 0.0
    %994 = vmatprep.subr.mxu0 0.0
    %995 = vmatpush2.msra.mxu0 0.0
    %996 = vmatprep.subr.mxu0 0.0
    %997 = vmatpush2.msra.mxu0 0.0
    %998 = vmatprep.subr.mxu0 0.0
    %999 = vmatpush2.msra.mxu0 0.0
    %1000 = vmatprep.subr.mxu0 0.0
    %1001 = vmatpush2.msra.mxu0 0.0
    %1002 = vmatprep.subr.mxu0 0.0
    %1003 = vmatpush2.msra.mxu0 0.0
    %1004 = vmatprep.subr.mxu0 0.0
    %1005 = vmatpush2.msra.mxu0 0.0
    %1006 = vmatprep.subr.mxu0 0.0
    %1007 = vmatpush2.msra.mxu0 0.0
    %1008 = vmatprep.subr.mxu0 0.0
    %1009 = vmatpush2.msra.mxu0 0.0
    %1010 = vmatprep.subr.mxu0 0.0
    %1011 = vmatpush2.msra.mxu0 0.0
    %1012 = vmatprep.subr.mxu0 0.0
    %1013 = vmatpush2.msra.mxu0 0.0
    %1014 = vmatprep.subr.mxu0 0.0
    %1015 = vmatpush2.msra.mxu0 0.0
    %1016 = vmatprep.subr.mxu0 0.0
    %1017 = vmatpush2.msra.mxu0 0.0
    %1018 = vmatprep.subr.mxu0 0.0
    %1019 = vmatpush2.msra.mxu0 0.0
    %1020 = vmatprep.subr.mxu0 0.0
    %1021 = vmatpush2.msra.mxu0 0.0
    %1022 = vmatprep.subr.mxu0 0.0
    %1023 = vmatpush2.msra.mxu0 0.0
    %1024 = vmatprep.mubr.f32.mxu0 0.0
    %1025 = vmatmul.mubr.f32.gmra.mxu0 %v658
    %v1026 = vpop.f32.mrf.mxu0
    %v1027 = vadd.f32 0.0, %v1026
    %v1028 = vpop.f32.mrf.mxu0
    %1029 = vmatprep.mubr.f32.mxu0 0.0
    %1030 = vmatmul.mubr.f32.gmra.mxu0 %v707
    %v1031 = vpop.f32.mrf.mxu0
    %v1032 = vadd.f32 0.0, %v1031
    %v1033 = vpop.f32.mrf.mxu0
    %1034 = vmatprep.mubr.f32.mxu0 0.0
    %1035 = vmatmul.mubr.f32.gmra.mxu0 %v756
    %v1036 = vpop.f32.mrf.mxu0
    %v1037 = vadd.f32 0.0, %v1036
    %v1038 = vpop.f32.mrf.mxu0
    %1039 = vmatprep.mubr.f32.mxu0 0.0
    %1040 = vmatmul.mubr.f32.gmra.mxu0 %v805
    %v1041 = vpop.f32.mrf.mxu0
    %v1042 = vadd.f32 0.0, %v1041
    %v1043 = vpop.f32.mrf.mxu0
    %1044 = vmatprep.mubr.f32.mxu0 0.0
    %1045 = vmatmul.mubr.f32.gmra.mxu0 %v854
    %v1046 = vpop.f32.mrf.mxu0
    %v1047 = vadd.f32 0.0, %v1046
    %v1048 = vpop.f32.mrf.mxu0
    %1049 = vmatprep.mubr.f32.mxu0 0.0
    %1050 = vmatmul.mubr.f32.gmra.mxu0 %v903
    %v1051 = vpop.f32.mrf.mxu0
    %v1052 = vadd.f32 0.0, %v1051
    %v1053 = vpop.f32.mrf.mxu0
    %1054 = vmatprep.mubr.f32.mxu0 0.0
    %1055 = vmatmul.mubr.f32.gmra.mxu0 %v952
    %v1056 = vpop.f32.mrf.mxu0
    %v1057 = vadd.f32 0.0, %v1056
    %v1058 = vpop.f32.mrf.mxu0
    %1059 = vdwg.mxu0
    %v1067 = vcombine.high %v1027, %v1027
    %v1069 = vunpack.c.l.s4 1966171168
    %v1070 = vunpack.c.0.s8 %v1069
    %v1071 = vlaneseq
    %v1072 = vshrl.u32 %v1071, 7
    %v1073 = vsub.s32 %v1070, %v1072
    %v1074 = vrot.slane %v1027, %v1073
    %v1076 = vunpack.c.l.s4 1966171168
    %v1077 = vunpack.c.0.s8 %v1076
    %v1078 = vlaneseq
    %v1079 = vshrl.u32 %v1078, 7
    %v1080 = vsub.s32 %v1077, %v1079
    %v1081 = vrot.slane %v1067, %v1080
    %v1082 = vcombine.high %v1074, %v1074
    %v1083 = vcombine.high %v1081, %v1081
    %v1085 = vunpack.c.l.s4 1966171168
    %v1086 = vunpack.c.0.s8 %v1085
    %v1087 = vlaneseq
    %v1088 = vshrl.u32 %v1087, 7
    %v1089 = vsub.s32 %v1086, %v1088
    %v1090 = vrot.slane %v1074, %v1089
    %v1092 = vunpack.c.l.s4 1966171168
    %v1093 = vunpack.c.0.s8 %v1092
    %v1094 = vlaneseq
    %v1095 = vshrl.u32 %v1094, 7
    %v1096 = vsub.s32 %v1093, %v1095
    %v1097 = vrot.slane %v1081, %v1096
    %v1099 = vunpack.c.l.s4 1966171168
    %v1100 = vunpack.c.0.s8 %v1099
    %v1101 = vlaneseq
    %v1102 = vshrl.u32 %v1101, 7
    %v1103 = vsub.s32 %v1100, %v1102
    %v1104 = vrot.slane %v1082, %v1103
    %v1106 = vunpack.c.l.s4 1966171168
    %v1107 = vunpack.c.0.s8 %v1106
    %v1108 = vlaneseq
    %v1109 = vshrl.u32 %v1108, 7
    %v1110 = vsub.s32 %v1107, %v1109
    %v1111 = vrot.slane %v1083, %v1110
    %v1112 = vcombine.high %v1090, %v1090
    %v1113 = vcombine.high %v1097, %v1097
    %v1114 = vcombine.high %v1104, %v1104
    %v1115 = vcombine.high %v1111, %v1111
    %v1116 = vcombine.high %v1032, %v1032
    %v1118 = vunpack.c.l.s4 1966171168
    %v1119 = vunpack.c.0.s8 %v1118
    %v1120 = vlaneseq
    %v1121 = vshrl.u32 %v1120, 7
    %v1122 = vsub.s32 %v1119, %v1121
    %v1123 = vrot.slane %v1032, %v1122
    %v1125 = vunpack.c.l.s4 1966171168
    %v1126 = vunpack.c.0.s8 %v1125
    %v1127 = vlaneseq
    %v1128 = vshrl.u32 %v1127, 7
    %v1129 = vsub.s32 %v1126, %v1128
    %v1130 = vrot.slane %v1116, %v1129
    %v1131 = vcombine.high %v1123, %v1123
    %v1132 = vcombine.high %v1130, %v1130
    %v1134 = vunpack.c.l.s4 1966171168
    %v1135 = vunpack.c.0.s8 %v1134
    %v1136 = vlaneseq
    %v1137 = vshrl.u32 %v1136, 7
    %v1138 = vsub.s32 %v1135, %v1137
    %v1139 = vrot.slane %v1123, %v1138
    %v1141 = vunpack.c.l.s4 1966171168
    %v1142 = vunpack.c.0.s8 %v1141
    %v1143 = vlaneseq
    %v1144 = vshrl.u32 %v1143, 7
    %v1145 = vsub.s32 %v1142, %v1144
    %v1146 = vrot.slane %v1130, %v1145
    %v1148 = vunpack.c.l.s4 1966171168
    %v1149 = vunpack.c.0.s8 %v1148
    %v1150 = vlaneseq
    %v1151 = vshrl.u32 %v1150, 7
    %v1152 = vsub.s32 %v1149, %v1151
    %v1153 = vrot.slane %v1131, %v1152
    %v1155 = vunpack.c.l.s4 1966171168
    %v1156 = vunpack.c.0.s8 %v1155
    %v1157 = vlaneseq
    %v1158 = vshrl.u32 %v1157, 7
    %v1159 = vsub.s32 %v1156, %v1158
    %v1160 = vrot.slane %v1132, %v1159
    %v1161 = vcombine.high %v1139, %v1139
    %v1162 = vcombine.high %v1146, %v1146
    %v1163 = vcombine.high %v1153, %v1153
    %v1164 = vcombine.high %v1160, %v1160
    %v1165 = vcombine.high %v1037, %v1037
    %v1167 = vunpack.c.l.s4 1966171168
    %v1168 = vunpack.c.0.s8 %v1167
    %v1169 = vlaneseq
    %v1170 = vshrl.u32 %v1169, 7
    %v1171 = vsub.s32 %v1168, %v1170
    %v1172 = vrot.slane %v1037, %v1171
    %v1174 = vunpack.c.l.s4 1966171168
    %v1175 = vunpack.c.0.s8 %v1174
    %v1176 = vlaneseq
    %v1177 = vshrl.u32 %v1176, 7
    %v1178 = vsub.s32 %v1175, %v1177
    %v1179 = vrot.slane %v1165, %v1178
    %v1180 = vcombine.high %v1172, %v1172
    %v1181 = vcombine.high %v1179, %v1179
    %v1183 = vunpack.c.l.s4 1966171168
    %v1184 = vunpack.c.0.s8 %v1183
    %v1185 = vlaneseq
    %v1186 = vshrl.u32 %v1185, 7
    %v1187 = vsub.s32 %v1184, %v1186
    %v1188 = vrot.slane %v1172, %v1187
    %v1190 = vunpack.c.l.s4 1966171168
    %v1191 = vunpack.c.0.s8 %v1190
    %v1192 = vlaneseq
    %v1193 = vshrl.u32 %v1192, 7
    %v1194 = vsub.s32 %v1191, %v1193
    %v1195 = vrot.slane %v1179, %v1194
    %v1197 = vunpack.c.l.s4 1966171168
    %v1198 = vunpack.c.0.s8 %v1197
    %v1199 = vlaneseq
    %v1200 = vshrl.u32 %v1199, 7
    %v1201 = vsub.s32 %v1198, %v1200
    %v1202 = vrot.slane %v1180, %v1201
    %v1204 = vunpack.c.l.s4 1966171168
    %v1205 = vunpack.c.0.s8 %v1204
    %v1206 = vlaneseq
    %v1207 = vshrl.u32 %v1206, 7
    %v1208 = vsub.s32 %v1205, %v1207
    %v1209 = vrot.slane %v1181, %v1208
    %v1210 = vcombine.high %v1188, %v1188
    %v1211 = vcombine.high %v1195, %v1195
    %v1212 = vcombine.high %v1202, %v1202
    %v1213 = vcombine.high %v1209, %v1209
    %v1214 = vcombine.high %v1042, %v1042
    %v1216 = vunpack.c.l.s4 1966171168
    %v1217 = vunpack.c.0.s8 %v1216
    %v1218 = vlaneseq
    %v1219 = vshrl.u32 %v1218, 7
    %v1220 = vsub.s32 %v1217, %v1219
    %v1221 = vrot.slane %v1042, %v1220
    %v1223 = vunpack.c.l.s4 1966171168
    %v1224 = vunpack.c.0.s8 %v1223
    %v1225 = vlaneseq
    %v1226 = vshrl.u32 %v1225, 7
    %v1227 = vsub.s32 %v1224, %v1226
    %v1228 = vrot.slane %v1214, %v1227
    %v1229 = vcombine.high %v1221, %v1221
    %v1230 = vcombine.high %v1228, %v1228
    %v1232 = vunpack.c.l.s4 1966171168
    %v1233 = vunpack.c.0.s8 %v1232
    %v1234 = vlaneseq
    %v1235 = vshrl.u32 %v1234, 7
    %v1236 = vsub.s32 %v1233, %v1235
    %v1237 = vrot.slane %v1221, %v1236
    %v1239 = vunpack.c.l.s4 1966171168
    %v1240 = vunpack.c.0.s8 %v1239
    %v1241 = vlaneseq
    %v1242 = vshrl.u32 %v1241, 7
    %v1243 = vsub.s32 %v1240, %v1242
    %v1244 = vrot.slane %v1228, %v1243
    %v1246 = vunpack.c.l.s4 1966171168
    %v1247 = vunpack.c.0.s8 %v1246
    %v1248 = vlaneseq
    %v1249 = vshrl.u32 %v1248, 7
    %v1250 = vsub.s32 %v1247, %v1249
    %v1251 = vrot.slane %v1229, %v1250
    %v1253 = vunpack.c.l.s4 1966171168
    %v1254 = vunpack.c.0.s8 %v1253
    %v1255 = vlaneseq
    %v1256 = vshrl.u32 %v1255, 7
    %v1257 = vsub.s32 %v1254, %v1256
    %v1258 = vrot.slane %v1230, %v1257
    %v1259 = vcombine.high %v1237, %v1237
    %v1260 = vcombine.high %v1244, %v1244
    %v1261 = vcombine.high %v1251, %v1251
    %v1262 = vcombine.high %v1258, %v1258
    %v1263 = vcombine.high %v1047, %v1047
    %v1265 = vunpack.c.l.s4 1966171168
    %v1266 = vunpack.c.0.s8 %v1265
    %v1267 = vlaneseq
    %v1268 = vshrl.u32 %v1267, 7
    %v1269 = vsub.s32 %v1266, %v1268
    %v1270 = vrot.slane %v1047, %v1269
    %v1272 = vunpack.c.l.s4 1966171168
    %v1273 = vunpack.c.0.s8 %v1272
    %v1274 = vlaneseq
    %v1275 = vshrl.u32 %v1274, 7
    %v1276 = vsub.s32 %v1273, %v1275
    %v1277 = vrot.slane %v1263, %v1276
    %v1278 = vcombine.high %v1270, %v1270
    %v1279 = vcombine.high %v1277, %v1277
    %v1281 = vunpack.c.l.s4 1966171168
    %v1282 = vunpack.c.0.s8 %v1281
    %v1283 = vlaneseq
    %v1284 = vshrl.u32 %v1283, 7
    %v1285 = vsub.s32 %v1282, %v1284
    %v1286 = vrot.slane %v1270, %v1285
    %v1288 = vunpack.c.l.s4 1966171168
    %v1289 = vunpack.c.0.s8 %v1288
    %v1290 = vlaneseq
    %v1291 = vshrl.u32 %v1290, 7
    %v1292 = vsub.s32 %v1289, %v1291
    %v1293 = vrot.slane %v1277, %v1292
    %v1295 = vunpack.c.l.s4 1966171168
    %v1296 = vunpack.c.0.s8 %v1295
    %v1297 = vlaneseq
    %v1298 = vshrl.u32 %v1297, 7
    %v1299 = vsub.s32 %v1296, %v1298
    %v1300 = vrot.slane %v1278, %v1299
    %v1302 = vunpack.c.l.s4 1966171168
    %v1303 = vunpack.c.0.s8 %v1302
    %v1304 = vlaneseq
    %v1305 = vshrl.u32 %v1304, 7
    %v1306 = vsub.s32 %v1303, %v1305
    %v1307 = vrot.slane %v1279, %v1306
    %v1308 = vcombine.high %v1286, %v1286
    %v1309 = vcombine.high %v1293, %v1293
    %v1310 = vcombine.high %v1300, %v1300
    %v1311 = vcombine.high %v1307, %v1307
    %v1312 = vcombine.high %v1052, %v1052
    %v1314 = vunpack.c.l.s4 1966171168
    %v1315 = vunpack.c.0.s8 %v1314
    %v1316 = vlaneseq
    %v1317 = vshrl.u32 %v1316, 7
    %v1318 = vsub.s32 %v1315, %v1317
    %v1319 = vrot.slane %v1052, %v1318
    %v1321 = vunpack.c.l.s4 1966171168
    %v1322 = vunpack.c.0.s8 %v1321
    %v1323 = vlaneseq
    %v1324 = vshrl.u32 %v1323, 7
    %v1325 = vsub.s32 %v1322, %v1324
    %v1326 = vrot.slane %v1312, %v1325
    %v1327 = vcombine.high %v1319, %v1319
    %v1328 = vcombine.high %v1326, %v1326
    %v1330 = vunpack.c.l.s4 1966171168
    %v1331 = vunpack.c.0.s8 %v1330
    %v1332 = vlaneseq
    %v1333 = vshrl.u32 %v1332, 7
    %v1334 = vsub.s32 %v1331, %v1333
    %v1335 = vrot.slane %v1319, %v1334
    %v1337 = vunpack.c.l.s4 1966171168
    %v1338 = vunpack.c.0.s8 %v1337
    %v1339 = vlaneseq
    %v1340 = vshrl.u32 %v1339, 7
    %v1341 = vsub.s32 %v1338, %v1340
    %v1342 = vrot.slane %v1326, %v1341
    %v1344 = vunpack.c.l.s4 1966171168
    %v1345 = vunpack.c.0.s8 %v1344
    %v1346 = vlaneseq
    %v1347 = vshrl.u32 %v1346, 7
    %v1348 = vsub.s32 %v1345, %v1347
    %v1349 = vrot.slane %v1327, %v1348
    %v1351 = vunpack.c.l.s4 1966171168
    %v1352 = vunpack.c.0.s8 %v1351
    %v1353 = vlaneseq
    %v1354 = vshrl.u32 %v1353, 7
    %v1355 = vsub.s32 %v1352, %v1354
    %v1356 = vrot.slane %v1328, %v1355
    %v1357 = vcombine.high %v1335, %v1335
    %v1358 = vcombine.high %v1342, %v1342
    %v1359 = vcombine.high %v1349, %v1349
    %v1360 = vcombine.high %v1356, %v1356
    %v1361 = vcombine.high %v1057, %v1057
    %v1363 = vunpack.c.l.s4 1966171168
    %v1364 = vunpack.c.0.s8 %v1363
    %v1365 = vlaneseq
    %v1366 = vshrl.u32 %v1365, 7
    %v1367 = vsub.s32 %v1364, %v1366
    %v1368 = vrot.slane %v1057, %v1367
    %v1370 = vunpack.c.l.s4 1966171168
    %v1371 = vunpack.c.0.s8 %v1370
    %v1372 = vlaneseq
    %v1373 = vshrl.u32 %v1372, 7
    %v1374 = vsub.s32 %v1371, %v1373
    %v1375 = vrot.slane %v1361, %v1374
    %v1376 = vcombine.high %v1368, %v1368
    %v1377 = vcombine.high %v1375, %v1375
    %v1379 = vunpack.c.l.s4 1966171168
    %v1380 = vunpack.c.0.s8 %v1379
    %v1381 = vlaneseq
    %v1382 = vshrl.u32 %v1381, 7
    %v1383 = vsub.s32 %v1380, %v1382
    %v1384 = vrot.slane %v1368, %v1383
    %v1386 = vunpack.c.l.s4 1966171168
    %v1387 = vunpack.c.0.s8 %v1386
    %v1388 = vlaneseq
    %v1389 = vshrl.u32 %v1388, 7
    %v1390 = vsub.s32 %v1387, %v1389
    %v1391 = vrot.slane %v1375, %v1390
    %v1393 = vunpack.c.l.s4 1966171168
    %v1394 = vunpack.c.0.s8 %v1393
    %v1395 = vlaneseq
    %v1396 = vshrl.u32 %v1395, 7
    %v1397 = vsub.s32 %v1394, %v1396
    %v1398 = vrot.slane %v1376, %v1397
    %v1400 = vunpack.c.l.s4 1966171168
    %v1401 = vunpack.c.0.s8 %v1400
    %v1402 = vlaneseq
    %v1403 = vshrl.u32 %v1402, 7
    %v1404 = vsub.s32 %v1401, %v1403
    %v1405 = vrot.slane %v1377, %v1404
    %v1406 = vcombine.high %v1384, %v1384
    %v1407 = vcombine.high %v1391, %v1391
    %v1408 = vcombine.high %v1398, %v1398
    %v1409 = vcombine.high %v1405, %v1405
    %v1466 = vlaneseq
    %v1467 = vshrl.u32 %v1466, 7
    %v1468 = vsub.s32 0, %v1467
    %v1469 = vrot.slane %v608, %v1468
    %v1471 = vcombine.high %v1469, %v1469
    %v1473 = vunpack.c.l.s4 1966171168
    %v1474 = vunpack.c.0.s8 %v1473
    %v1475 = vlaneseq
    %v1476 = vshrl.u32 %v1475, 7
    %v1477 = vsub.s32 %v1474, %v1476
    %v1478 = vrot.slane %v1469, %v1477
    %v1480 = vunpack.c.l.s4 1966171168
    %v1481 = vunpack.c.0.s8 %v1480
    %v1482 = vlaneseq
    %v1483 = vshrl.u32 %v1482, 7
    %v1484 = vsub.s32 %v1481, %v1483
    %v1485 = vrot.slane %v1471, %v1484
    %v1486 = vcombine.high %v1478, %v1478
    %v1487 = vcombine.high %v1485, %v1485
    %v1489 = vunpack.c.l.s4 1966171168
    %v1490 = vunpack.c.0.s8 %v1489
    %v1491 = vlaneseq
    %v1492 = vshrl.u32 %v1491, 7
    %v1493 = vsub.s32 %v1490, %v1492
    %v1494 = vrot.slane %v1478, %v1493
    %v1496 = vunpack.c.l.s4 1966171168
    %v1497 = vunpack.c.0.s8 %v1496
    %v1498 = vlaneseq
    %v1499 = vshrl.u32 %v1498, 7
    %v1500 = vsub.s32 %v1497, %v1499
    %v1501 = vrot.slane %v1485, %v1500
    %v1503 = vunpack.c.l.s4 1966171168
    %v1504 = vunpack.c.0.s8 %v1503
    %v1505 = vlaneseq
    %v1506 = vshrl.u32 %v1505, 7
    %v1507 = vsub.s32 %v1504, %v1506
    %v1508 = vrot.slane %v1486, %v1507
    %v1510 = vunpack.c.l.s4 1966171168
    %v1511 = vunpack.c.0.s8 %v1510
    %v1512 = vlaneseq
    %v1513 = vshrl.u32 %v1512, 7
    %v1514 = vsub.s32 %v1511, %v1513
    %v1515 = vrot.slane %v1487, %v1514
    %v1516 = vcombine.high %v1494, %v1494
    %v1517 = vcombine.high %v1501, %v1501
    %v1518 = vcombine.high %v1508, %v1508
    %v1526 = vadd.f32 %v1090, %v1494
    %v1527 = vadd.f32 %v1104, %v1508
    %v1528 = vadd.f32 %v1112, %v1516
    %v1529 = vadd.f32 %v1114, %v1518
    %v1530 = vadd.f32 %v1097, %v1501
    %v1531 = vadd.f32 %v1111, %v1515
    %v1532 = vadd.f32 %v1113, %v1517
    %v1533 = vadd.f32 %v1115, %v1494
    %v1534 = vadd.f32 %v1139, %v1508
    %v1535 = vadd.f32 %v1153, %v1516
    %v1536 = vadd.f32 %v1161, %v1518
    %v1537 = vadd.f32 %v1163, %v1501
    %v1538 = vadd.f32 %v1146, %v1515
    %v1539 = vadd.f32 %v1160, %v1517
    %v1540 = vadd.f32 %v1162, %v1494
    %v1541 = vadd.f32 %v1164, %v1508
    %v1542 = vadd.f32 %v1188, %v1516
    %v1543 = vadd.f32 %v1202, %v1518
    %v1544 = vadd.f32 %v1210, %v1501
    %v1545 = vadd.f32 %v1212, %v1515
    %v1546 = vadd.f32 %v1195, %v1517
    %v1547 = vadd.f32 %v1209, %v1494
    %v1548 = vadd.f32 %v1211, %v1508
    %v1549 = vadd.f32 %v1213, %v1516
    %v1550 = vadd.f32 %v1237, %v1518
    %v1551 = vadd.f32 %v1251, %v1501
    %v1552 = vadd.f32 %v1259, %v1515
    %v1553 = vadd.f32 %v1261, %v1517
    %v1554 = vadd.f32 %v1244, %v1494
    %v1555 = vadd.f32 %v1258, %v1508
    %v1556 = vadd.f32 %v1260, %v1516
    %v1557 = vadd.f32 %v1262, %v1518
    %v1558 = vadd.f32 %v1286, %v1501
    %v1559 = vadd.f32 %v1300, %v1515
    %v1560 = vadd.f32 %v1308, %v1517
    %v1561 = vadd.f32 %v1310, %v1494
    %v1562 = vadd.f32 %v1293, %v1508
    %v1563 = vadd.f32 %v1307, %v1516
    %v1564 = vadd.f32 %v1309, %v1518
    %v1565 = vadd.f32 %v1311, %v1501
    %v1566 = vadd.f32 %v1335, %v1515
    %v1567 = vadd.f32 %v1349, %v1517
    %v1568 = vadd.f32 %v1357, %v1494
    %v1569 = vadd.f32 %v1359, %v1508
    %v1570 = vadd.f32 %v1342, %v1516
    %v1571 = vadd.f32 %v1356, %v1518
    %v1572 = vadd.f32 %v1358, %v1501
    %v1573 = vadd.f32 %v1360, %v1515
    %v1574 = vadd.f32 %v1384, %v1517
    %v1575 = vadd.f32 %v1398, %v1494
    %v1576 = vadd.f32 %v1406, %v1508
    %v1577 = vadd.f32 %v1408, %v1516
    %v1578 = vadd.f32 %v1391, %v1518
    %v1579 = vadd.f32 %v1405, %v1501
    %v1580 = vadd.f32 %v1407, %v1515
    %v1581 = vadd.f32 %v1409, %v1517
    %v1582 = vmax.f32 %v1526, 0.0
    %v1583 = vmax.f32 %v1527, 0.0
    %v1584 = vmax.f32 %v1528, 0.0
    %v1585 = vmax.f32 %v1529, 0.0
    %v1586 = vmax.f32 %v1530, 0.0
    %v1587 = vmax.f32 %v1531, 0.0
    %v1588 = vmax.f32 %v1532, 0.0
    %v1589 = vmax.f32 %v1533, 0.0
    %v1590 = vmax.f32 %v1534, 0.0
    %v1591 = vmax.f32 %v1535, 0.0
    %v1592 = vmax.f32 %v1536, 0.0
    %v1593 = vmax.f32 %v1537, 0.0
    %v1594 = vmax.f32 %v1538, 0.0
    %v1595 = vmax.f32 %v1539, 0.0
    %v1596 = vmax.f32 %v1540, 0.0
    %v1597 = vmax.f32 %v1541, 0.0
    %v1598 = vmax.f32 %v1542, 0.0
    %v1599 = vmax.f32 %v1543, 0.0
    %v1600 = vmax.f32 %v1544, 0.0
    %v1601 = vmax.f32 %v1545, 0.0
    %v1602 = vmax.f32 %v1546, 0.0
    %v1603 = vmax.f32 %v1547, 0.0
    %v1604 = vmax.f32 %v1548, 0.0
    %v1605 = vmax.f32 %v1549, 0.0
    %v1606 = vmax.f32 %v1550, 0.0
    %v1607 = vmax.f32 %v1551, 0.0
    %v1608 = vmax.f32 %v1552, 0.0
    %v1609 = vmax.f32 %v1553, 0.0
    %v1610 = vmax.f32 %v1554, 0.0
    %v1611 = vmax.f32 %v1555, 0.0
    %v1612 = vmax.f32 %v1556, 0.0
    %v1613 = vmax.f32 %v1557, 0.0
    %v1614 = vmax.f32 %v1558, 0.0
    %v1615 = vmax.f32 %v1559, 0.0
    %v1616 = vmax.f32 %v1560, 0.0
    %v1617 = vmax.f32 %v1561, 0.0
    %v1618 = vmax.f32 %v1562, 0.0
    %v1619 = vmax.f32 %v1563, 0.0
    %v1620 = vmax.f32 %v1564, 0.0
    %v1621 = vmax.f32 %v1565, 0.0
    %v1622 = vmax.f32 %v1566, 0.0
    %v1623 = vmax.f32 %v1567, 0.0
    %v1624 = vmax.f32 %v1568, 0.0
    %v1625 = vmax.f32 %v1569, 0.0
    %v1626 = vmax.f32 %v1570, 0.0
    %v1627 = vmax.f32 %v1571, 0.0
    %v1628 = vmax.f32 %v1572, 0.0
    %v1629 = vmax.f32 %v1573, 0.0
    %v1630 = vmax.f32 %v1574, 0.0
    %v1631 = vmax.f32 %v1575, 0.0
    %v1632 = vmax.f32 %v1576, 0.0
    %v1633 = vmax.f32 %v1577, 0.0
    %v1634 = vmax.f32 %v1578, 0.0
    %v1635 = vmax.f32 %v1579, 0.0
    %v1636 = vmax.f32 %v1580, 0.0
    %v1637 = vmax.f32 %v1581, 0.0
    %v1639 = vcombine.high %v609, %v609
    %v1641 = vunpack.c.l.s4 1966171168
    %v1642 = vunpack.c.0.s8 %v1641
    %v1643 = vlaneseq
    %v1644 = vshrl.u32 %v1643, 7
    %v1645 = vsub.s32 %v1642, %v1644
    %v1646 = vrot.slane %v609, %v1645
    %v1648 = vunpack.c.l.s4 1966171168
    %v1649 = vunpack.c.0.s8 %v1648
    %v1650 = vlaneseq
    %v1651 = vshrl.u32 %v1650, 7
    %v1652 = vsub.s32 %v1649, %v1651
    %v1653 = vrot.slane %v1639, %v1652
    %v1654 = vcombine.high %v1646, %v1646
    %v1655 = vcombine.high %v1653, %v1653
    %v1657 = vunpack.c.l.s4 1966171168
    %v1658 = vunpack.c.0.s8 %v1657
    %v1659 = vlaneseq
    %v1660 = vshrl.u32 %v1659, 7
    %v1661 = vsub.s32 %v1658, %v1660
    %v1662 = vrot.slane %v1646, %v1661
    %v1664 = vunpack.c.l.s4 1966171168
    %v1665 = vunpack.c.0.s8 %v1664
    %v1666 = vlaneseq
    %v1667 = vshrl.u32 %v1666, 7
    %v1668 = vsub.s32 %v1665, %v1667
    %v1669 = vrot.slane %v1653, %v1668
    %v1671 = vunpack.c.l.s4 1966171168
    %v1672 = vunpack.c.0.s8 %v1671
    %v1673 = vlaneseq
    %v1674 = vshrl.u32 %v1673, 7
    %v1675 = vsub.s32 %v1672, %v1674
    %v1676 = vrot.slane %v1654, %v1675
    %v1678 = vunpack.c.l.s4 1966171168
    %v1679 = vunpack.c.0.s8 %v1678
    %v1680 = vlaneseq
    %v1681 = vshrl.u32 %v1680, 7
    %v1682 = vsub.s32 %v1679, %v1681
    %v1683 = vrot.slane %v1655, %v1682
    %v1684 = vcombine.high %v1662, %v1662
    %v1685 = vcombine.high %v1669, %v1669
    %v1686 = vcombine.high %v1676, %v1676
    %v1694 = vmul.f32 %v1582, %v1662
    %v1695 = vmul.f32 %v1583, %v1676
    %v1696 = vmul.f32 %v1584, %v1684
    %v1697 = vmul.f32 %v1585, %v1686
    %v1698 = vmul.f32 %v1586, %v1669
    %v1699 = vmul.f32 %v1587, %v1683
    %v1700 = vmul.f32 %v1588, %v1685
    %v1701 = vmul.f32 %v1589, %v1662
    %v1702 = vmul.f32 %v1590, %v1676
    %v1703 = vmul.f32 %v1591, %v1684
    %v1704 = vmul.f32 %v1592, %v1686
    %v1705 = vmul.f32 %v1593, %v1669
    %v1706 = vmul.f32 %v1594, %v1683
    %v1707 = vmul.f32 %v1595, %v1685
    %v1708 = vmul.f32 %v1596, %v1662
    %v1709 = vmul.f32 %v1597, %v1676
    %v1710 = vmul.f32 %v1598, %v1684
    %v1711 = vmul.f32 %v1599, %v1686
    %v1712 = vmul.f32 %v1600, %v1669
    %v1713 = vmul.f32 %v1601, %v1683
    %v1714 = vmul.f32 %v1602, %v1685
    %v1715 = vmul.f32 %v1603, %v1662
    %v1716 = vmul.f32 %v1604, %v1676
    %v1717 = vmul.f32 %v1605, %v1684
    %v1718 = vmul.f32 %v1606, %v1686
    %v1719 = vmul.f32 %v1607, %v1669
    %v1720 = vmul.f32 %v1608, %v1683
    %v1721 = vmul.f32 %v1609, %v1685
    %v1722 = vmul.f32 %v1610, %v1662
    %v1723 = vmul.f32 %v1611, %v1676
    %v1724 = vmul.f32 %v1612, %v1684
    %v1725 = vmul.f32 %v1613, %v1686
    %v1726 = vmul.f32 %v1614, %v1669
    %v1727 = vmul.f32 %v1615, %v1683
    %v1728 = vmul.f32 %v1616, %v1685
    %v1729 = vmul.f32 %v1617, %v1662
    %v1730 = vmul.f32 %v1618, %v1676
    %v1731 = vmul.f32 %v1619, %v1684
    %v1732 = vmul.f32 %v1620, %v1686
    %v1733 = vmul.f32 %v1621, %v1669
    %v1734 = vmul.f32 %v1622, %v1683
    %v1735 = vmul.f32 %v1623, %v1685
    %v1736 = vmul.f32 %v1624, %v1662
    %v1737 = vmul.f32 %v1625, %v1676
    %v1738 = vmul.f32 %v1626, %v1684
    %v1739 = vmul.f32 %v1627, %v1686
    %v1740 = vmul.f32 %v1628, %v1669
    %v1741 = vmul.f32 %v1629, %v1683
    %v1742 = vmul.f32 %v1630, %v1685
    %v1743 = vmul.f32 %v1631, %v1662
    %v1744 = vmul.f32 %v1632, %v1676
    %v1745 = vmul.f32 %v1633, %v1684
    %v1746 = vmul.f32 %v1634, %v1686
    %v1747 = vmul.f32 %v1635, %v1669
    %v1748 = vmul.f32 %v1636, %v1683
    %v1749 = vmul.f32 %v1637, %v1685
    %v1806 = vcombine.low %v1694, %v1695
    %v1807 = vcombine.low %v1696, %v1697
    %v1808 = vcombine.low %v1698, %v1699
    %v1810 = vunpack.c.l.s4 1966171168
    %v1811 = vunpack.c.0.s8 %v1810
    %v1812 = vlaneseq
    %v1813 = vshrl.u32 %v1812, 7
    %v1814 = vsub.s32 %v1811, %v1813
    %v1815 = vrot.slane %v1806, %v1814
    %v1817 = vunpack.c.l.s4 1966171168
    %v1818 = vunpack.c.0.s8 %v1817
    %v1819 = vlaneseq
    %v1820 = vshrl.u32 %v1819, 7
    %v1821 = vsub.s32 %v1818, %v1820
    %v1822 = vrot.slane %v1807, %v1821
    %v1824 = vunpack.c.l.s4 1966171168
    %v1825 = vunpack.c.0.s8 %v1824
    %v1826 = vlaneseq
    %v1827 = vshrl.u32 %v1826, 7
    %v1828 = vsub.s32 %v1825, %v1827
    %v1829 = vrot.slane %v1808, %v1828
    %v1831 = vunpack.c.l.s4 1966171168
    %v1832 = vunpack.c.0.s8 %v1831
    %v1833 = vlaneseq
    %v1834 = vshrl.u32 %v1833, 7
    %v1835 = vsub.s32 %v1832, %v1834
    %v1836 = vrot.slane %v1700, %v1835
    %v1837 = vcombine.low %v1815, %v1822
    %v1838 = vcombine.low %v1829, %v1836
    %v1840 = vunpack.c.l.s4 1966171168
    %v1841 = vunpack.c.0.s8 %v1840
    %v1842 = vlaneseq
    %v1843 = vshrl.u32 %v1842, 7
    %v1844 = vsub.s32 %v1841, %v1843
    %v1845 = vrot.slane %v1837, %v1844
    %v1847 = vunpack.c.l.s4 1966171168
    %v1848 = vunpack.c.0.s8 %v1847
    %v1849 = vlaneseq
    %v1850 = vshrl.u32 %v1849, 7
    %v1851 = vsub.s32 %v1848, %v1850
    %v1852 = vrot.slane %v1838, %v1851
    %v1853 = vcombine.low %v1845, %v1852
    %v1854 = vcombine.low %v1701, %v1702
    %v1855 = vcombine.low %v1703, %v1704
    %v1856 = vcombine.low %v1705, %v1706
    %v1858 = vunpack.c.l.s4 1966171168
    %v1859 = vunpack.c.0.s8 %v1858
    %v1860 = vlaneseq
    %v1861 = vshrl.u32 %v1860, 7
    %v1862 = vsub.s32 %v1859, %v1861
    %v1863 = vrot.slane %v1854, %v1862
    %v1865 = vunpack.c.l.s4 1966171168
    %v1866 = vunpack.c.0.s8 %v1865
    %v1867 = vlaneseq
    %v1868 = vshrl.u32 %v1867, 7
    %v1869 = vsub.s32 %v1866, %v1868
    %v1870 = vrot.slane %v1855, %v1869
    %v1872 = vunpack.c.l.s4 1966171168
    %v1873 = vunpack.c.0.s8 %v1872
    %v1874 = vlaneseq
    %v1875 = vshrl.u32 %v1874, 7
    %v1876 = vsub.s32 %v1873, %v1875
    %v1877 = vrot.slane %v1856, %v1876
    %v1879 = vunpack.c.l.s4 1966171168
    %v1880 = vunpack.c.0.s8 %v1879
    %v1881 = vlaneseq
    %v1882 = vshrl.u32 %v1881, 7
    %v1883 = vsub.s32 %v1880, %v1882
    %v1884 = vrot.slane %v1707, %v1883
    %v1885 = vcombine.low %v1863, %v1870
    %v1886 = vcombine.low %v1877, %v1884
    %v1888 = vunpack.c.l.s4 1966171168
    %v1889 = vunpack.c.0.s8 %v1888
    %v1890 = vlaneseq
    %v1891 = vshrl.u32 %v1890, 7
    %v1892 = vsub.s32 %v1889, %v1891
    %v1893 = vrot.slane %v1885, %v1892
    %v1895 = vunpack.c.l.s4 1966171168
    %v1896 = vunpack.c.0.s8 %v1895
    %v1897 = vlaneseq
    %v1898 = vshrl.u32 %v1897, 7
    %v1899 = vsub.s32 %v1896, %v1898
    %v1900 = vrot.slane %v1886, %v1899
    %v1901 = vcombine.low %v1893, %v1900
    %v1902 = vcombine.low %v1708, %v1709
    %v1903 = vcombine.low %v1710, %v1711
    %v1904 = vcombine.low %v1712, %v1713
    %v1906 = vunpack.c.l.s4 1966171168
    %v1907 = vunpack.c.0.s8 %v1906
    %v1908 = vlaneseq
    %v1909 = vshrl.u32 %v1908, 7
    %v1910 = vsub.s32 %v1907, %v1909
    %v1911 = vrot.slane %v1902, %v1910
    %v1913 = vunpack.c.l.s4 1966171168
    %v1914 = vunpack.c.0.s8 %v1913
    %v1915 = vlaneseq
    %v1916 = vshrl.u32 %v1915, 7
    %v1917 = vsub.s32 %v1914, %v1916
    %v1918 = vrot.slane %v1903, %v1917
    %v1920 = vunpack.c.l.s4 1966171168
    %v1921 = vunpack.c.0.s8 %v1920
    %v1922 = vlaneseq
    %v1923 = vshrl.u32 %v1922, 7
    %v1924 = vsub.s32 %v1921, %v1923
    %v1925 = vrot.slane %v1904, %v1924
    %v1927 = vunpack.c.l.s4 1966171168
    %v1928 = vunpack.c.0.s8 %v1927
    %v1929 = vlaneseq
    %v1930 = vshrl.u32 %v1929, 7
    %v1931 = vsub.s32 %v1928, %v1930
    %v1932 = vrot.slane %v1714, %v1931
    %v1933 = vcombine.low %v1911, %v1918
    %v1934 = vcombine.low %v1925, %v1932
    %v1936 = vunpack.c.l.s4 1966171168
    %v1937 = vunpack.c.0.s8 %v1936
    %v1938 = vlaneseq
    %v1939 = vshrl.u32 %v1938, 7
    %v1940 = vsub.s32 %v1937, %v1939
    %v1941 = vrot.slane %v1933, %v1940
    %v1943 = vunpack.c.l.s4 1966171168
    %v1944 = vunpack.c.0.s8 %v1943
    %v1945 = vlaneseq
    %v1946 = vshrl.u32 %v1945, 7
    %v1947 = vsub.s32 %v1944, %v1946
    %v1948 = vrot.slane %v1934, %v1947
    %v1949 = vcombine.low %v1941, %v1948
    %v1950 = vcombine.low %v1715, %v1716
    %v1951 = vcombine.low %v1717, %v1718
    %v1952 = vcombine.low %v1719, %v1720
    %v1954 = vunpack.c.l.s4 1966171168
    %v1955 = vunpack.c.0.s8 %v1954
    %v1956 = vlaneseq
    %v1957 = vshrl.u32 %v1956, 7
    %v1958 = vsub.s32 %v1955, %v1957
    %v1959 = vrot.slane %v1950, %v1958
    %v1961 = vunpack.c.l.s4 1966171168
    %v1962 = vunpack.c.0.s8 %v1961
    %v1963 = vlaneseq
    %v1964 = vshrl.u32 %v1963, 7
    %v1965 = vsub.s32 %v1962, %v1964
    %v1966 = vrot.slane %v1951, %v1965
    %v1968 = vunpack.c.l.s4 1966171168
    %v1969 = vunpack.c.0.s8 %v1968
    %v1970 = vlaneseq
    %v1971 = vshrl.u32 %v1970, 7
    %v1972 = vsub.s32 %v1969, %v1971
    %v1973 = vrot.slane %v1952, %v1972
    %v1975 = vunpack.c.l.s4 1966171168
    %v1976 = vunpack.c.0.s8 %v1975
    %v1977 = vlaneseq
    %v1978 = vshrl.u32 %v1977, 7
    %v1979 = vsub.s32 %v1976, %v1978
    %v1980 = vrot.slane %v1721, %v1979
    %v1981 = vcombine.low %v1959, %v1966
    %v1982 = vcombine.low %v1973, %v1980
    %v1984 = vunpack.c.l.s4 1966171168
    %v1985 = vunpack.c.0.s8 %v1984
    %v1986 = vlaneseq
    %v1987 = vshrl.u32 %v1986, 7
    %v1988 = vsub.s32 %v1985, %v1987
    %v1989 = vrot.slane %v1981, %v1988
    %v1991 = vunpack.c.l.s4 1966171168
    %v1992 = vunpack.c.0.s8 %v1991
    %v1993 = vlaneseq
    %v1994 = vshrl.u32 %v1993, 7
    %v1995 = vsub.s32 %v1992, %v1994
    %v1996 = vrot.slane %v1982, %v1995
    %v1997 = vcombine.low %v1989, %v1996
    %v1998 = vcombine.low %v1722, %v1723
    %v1999 = vcombine.low %v1724, %v1725
    %v2000 = vcombine.low %v1726, %v1727
    %v2002 = vunpack.c.l.s4 1966171168
    %v2003 = vunpack.c.0.s8 %v2002
    %v2004 = vlaneseq
    %v2005 = vshrl.u32 %v2004, 7
    %v2006 = vsub.s32 %v2003, %v2005
    %v2007 = vrot.slane %v1998, %v2006
    %v2009 = vunpack.c.l.s4 1966171168
    %v2010 = vunpack.c.0.s8 %v2009
    %v2011 = vlaneseq
    %v2012 = vshrl.u32 %v2011, 7
    %v2013 = vsub.s32 %v2010, %v2012
    %v2014 = vrot.slane %v1999, %v2013
    %v2016 = vunpack.c.l.s4 1966171168
    %v2017 = vunpack.c.0.s8 %v2016
    %v2018 = vlaneseq
    %v2019 = vshrl.u32 %v2018, 7
    %v2020 = vsub.s32 %v2017, %v2019
    %v2021 = vrot.slane %v2000, %v2020
    %v2023 = vunpack.c.l.s4 1966171168
    %v2024 = vunpack.c.0.s8 %v2023
    %v2025 = vlaneseq
    %v2026 = vshrl.u32 %v2025, 7
    %v2027 = vsub.s32 %v2024, %v2026
    %v2028 = vrot.slane %v1728, %v2027
    %v2029 = vcombine.low %v2007, %v2014
    %v2030 = vcombine.low %v2021, %v2028
    %v2032 = vunpack.c.l.s4 1966171168
    %v2033 = vunpack.c.0.s8 %v2032
    %v2034 = vlaneseq
    %v2035 = vshrl.u32 %v2034, 7
    %v2036 = vsub.s32 %v2033, %v2035
    %v2037 = vrot.slane %v2029, %v2036
    %v2039 = vunpack.c.l.s4 1966171168
    %v2040 = vunpack.c.0.s8 %v2039
    %v2041 = vlaneseq
    %v2042 = vshrl.u32 %v2041, 7
    %v2043 = vsub.s32 %v2040, %v2042
    %v2044 = vrot.slane %v2030, %v2043
    %v2045 = vcombine.low %v2037, %v2044
    %v2046 = vcombine.low %v1729, %v1730
    %v2047 = vcombine.low %v1731, %v1732
    %v2048 = vcombine.low %v1733, %v1734
    %v2050 = vunpack.c.l.s4 1966171168
    %v2051 = vunpack.c.0.s8 %v2050
    %v2052 = vlaneseq
    %v2053 = vshrl.u32 %v2052, 7
    %v2054 = vsub.s32 %v2051, %v2053
    %v2055 = vrot.slane %v2046, %v2054
    %v2057 = vunpack.c.l.s4 1966171168
    %v2058 = vunpack.c.0.s8 %v2057
    %v2059 = vlaneseq
    %v2060 = vshrl.u32 %v2059, 7
    %v2061 = vsub.s32 %v2058, %v2060
    %v2062 = vrot.slane %v2047, %v2061
    %v2064 = vunpack.c.l.s4 1966171168
    %v2065 = vunpack.c.0.s8 %v2064
    %v2066 = vlaneseq
    %v2067 = vshrl.u32 %v2066, 7
    %v2068 = vsub.s32 %v2065, %v2067
    %v2069 = vrot.slane %v2048, %v2068
    %v2071 = vunpack.c.l.s4 1966171168
    %v2072 = vunpack.c.0.s8 %v2071
    %v2073 = vlaneseq
    %v2074 = vshrl.u32 %v2073, 7
    %v2075 = vsub.s32 %v2072, %v2074
    %v2076 = vrot.slane %v1735, %v2075
    %v2077 = vcombine.low %v2055, %v2062
    %v2078 = vcombine.low %v2069, %v2076
    %v2080 = vunpack.c.l.s4 1966171168
    %v2081 = vunpack.c.0.s8 %v2080
    %v2082 = vlaneseq
    %v2083 = vshrl.u32 %v2082, 7
    %v2084 = vsub.s32 %v2081, %v2083
    %v2085 = vrot.slane %v2077, %v2084
    %v2087 = vunpack.c.l.s4 1966171168
    %v2088 = vunpack.c.0.s8 %v2087
    %v2089 = vlaneseq
    %v2090 = vshrl.u32 %v2089, 7
    %v2091 = vsub.s32 %v2088, %v2090
    %v2092 = vrot.slane %v2078, %v2091
    %v2093 = vcombine.low %v2085, %v2092
    %v2094 = vcombine.low %v1736, %v1737
    %v2095 = vcombine.low %v1738, %v1739
    %v2096 = vcombine.low %v1740, %v1741
    %v2098 = vunpack.c.l.s4 1966171168
    %v2099 = vunpack.c.0.s8 %v2098
    %v2100 = vlaneseq
    %v2101 = vshrl.u32 %v2100, 7
    %v2102 = vsub.s32 %v2099, %v2101
    %v2103 = vrot.slane %v2094, %v2102
    %v2105 = vunpack.c.l.s4 1966171168
    %v2106 = vunpack.c.0.s8 %v2105
    %v2107 = vlaneseq
    %v2108 = vshrl.u32 %v2107, 7
    %v2109 = vsub.s32 %v2106, %v2108
    %v2110 = vrot.slane %v2095, %v2109
    %v2112 = vunpack.c.l.s4 1966171168
    %v2113 = vunpack.c.0.s8 %v2112
    %v2114 = vlaneseq
    %v2115 = vshrl.u32 %v2114, 7
    %v2116 = vsub.s32 %v2113, %v2115
    %v2117 = vrot.slane %v2096, %v2116
    %v2119 = vunpack.c.l.s4 1966171168
    %v2120 = vunpack.c.0.s8 %v2119
    %v2121 = vlaneseq
    %v2122 = vshrl.u32 %v2121, 7
    %v2123 = vsub.s32 %v2120, %v2122
    %v2124 = vrot.slane %v1742, %v2123
    %v2125 = vcombine.low %v2103, %v2110
    %v2126 = vcombine.low %v2117, %v2124
    %v2128 = vunpack.c.l.s4 1966171168
    %v2129 = vunpack.c.0.s8 %v2128
    %v2130 = vlaneseq
    %v2131 = vshrl.u32 %v2130, 7
    %v2132 = vsub.s32 %v2129, %v2131
    %v2133 = vrot.slane %v2125, %v2132
    %v2135 = vunpack.c.l.s4 1966171168
    %v2136 = vunpack.c.0.s8 %v2135
    %v2137 = vlaneseq
    %v2138 = vshrl.u32 %v2137, 7
    %v2139 = vsub.s32 %v2136, %v2138
    %v2140 = vrot.slane %v2126, %v2139
    %v2141 = vcombine.low %v2133, %v2140
    %v2142 = vcombine.low %v1743, %v1744
    %v2143 = vcombine.low %v1745, %v1746
    %v2144 = vcombine.low %v1747, %v1748
    %v2146 = vunpack.c.l.s4 1966171168
    %v2147 = vunpack.c.0.s8 %v2146
    %v2148 = vlaneseq
    %v2149 = vshrl.u32 %v2148, 7
    %v2150 = vsub.s32 %v2147, %v2149
    %v2151 = vrot.slane %v2142, %v2150
    %v2153 = vunpack.c.l.s4 1966171168
    %v2154 = vunpack.c.0.s8 %v2153
    %v2155 = vlaneseq
    %v2156 = vshrl.u32 %v2155, 7
    %v2157 = vsub.s32 %v2154, %v2156
    %v2158 = vrot.slane %v2143, %v2157
    %v2160 = vunpack.c.l.s4 1966171168
    %v2161 = vunpack.c.0.s8 %v2160
    %v2162 = vlaneseq
    %v2163 = vshrl.u32 %v2162, 7
    %v2164 = vsub.s32 %v2161, %v2163
    %v2165 = vrot.slane %v2144, %v2164
    %v2167 = vunpack.c.l.s4 1966171168
    %v2168 = vunpack.c.0.s8 %v2167
    %v2169 = vlaneseq
    %v2170 = vshrl.u32 %v2169, 7
    %v2171 = vsub.s32 %v2168, %v2170
    %v2172 = vrot.slane %v1749, %v2171
    %v2173 = vcombine.low %v2151, %v2158
    %v2174 = vcombine.low %v2165, %v2172
    %v2176 = vunpack.c.l.s4 1966171168
    %v2177 = vunpack.c.0.s8 %v2176
    %v2178 = vlaneseq
    %v2179 = vshrl.u32 %v2178, 7
    %v2180 = vsub.s32 %v2177, %v2179
    %v2181 = vrot.slane %v2173, %v2180
    %v2183 = vunpack.c.l.s4 1966171168
    %v2184 = vunpack.c.0.s8 %v2183
    %v2185 = vlaneseq
    %v2186 = vshrl.u32 %v2185, 7
    %v2187 = vsub.s32 %v2184, %v2186
    %v2188 = vrot.slane %v2174, %v2187
    %v2189 = vcombine.low %v2181, %v2188
    %vm2198 = vcmask 1046528
    %v2199 = vsel %vm2198, %v1853, -inf
    %v2200 = vrot.slane %v2199, 4
    %v2201 = vmax.f32 %v2199, %v2200
    %v2202 = vrot.slane %v2201, 2
    %v2203 = vmax.f32 %v2201, %v2202
    %v2204 = vrot.slane %v2203, 1
    %v2205 = vmax.f32 %v2203, %v2204
    %v2206 = vsel %vm2198, %v1901, -inf
    %v2207 = vrot.slane %v2206, 4
    %v2208 = vmax.f32 %v2206, %v2207
    %v2209 = vrot.slane %v2208, 2
    %v2210 = vmax.f32 %v2208, %v2209
    %v2211 = vrot.slane %v2210, 1
    %v2212 = vmax.f32 %v2210, %v2211
    %v2213 = vsel %vm2198, %v1949, -inf
    %v2214 = vrot.slane %v2213, 4
    %v2215 = vmax.f32 %v2213, %v2214
    %v2216 = vrot.slane %v2215, 2
    %v2217 = vmax.f32 %v2215, %v2216
    %v2218 = vrot.slane %v2217, 1
    %v2219 = vmax.f32 %v2217, %v2218
    %v2220 = vsel %vm2198, %v1997, -inf
    %v2221 = vrot.slane %v2220, 4
    %v2222 = vmax.f32 %v2220, %v2221
    %v2223 = vrot.slane %v2222, 2
    %v2224 = vmax.f32 %v2222, %v2223
    %v2225 = vrot.slane %v2224, 1
    %v2226 = vmax.f32 %v2224, %v2225
    %v2227 = vsel %vm2198, %v2045, -inf
    %v2228 = vrot.slane %v2227, 4
    %v2229 = vmax.f32 %v2227, %v2228
    %v2230 = vrot.slane %v2229, 2
    %v2231 = vmax.f32 %v2229, %v2230
    %v2232 = vrot.slane %v2231, 1
    %v2233 = vmax.f32 %v2231, %v2232
    %v2234 = vsel %vm2198, %v2093, -inf
    %v2235 = vrot.slane %v2234, 4
    %v2236 = vmax.f32 %v2234, %v2235
    %v2237 = vrot.slane %v2236, 2
    %v2238 = vmax.f32 %v2236, %v2237
    %v2239 = vrot.slane %v2238, 1
    %v2240 = vmax.f32 %v2238, %v2239
    %v2241 = vsel %vm2198, %v2141, -inf
    %v2242 = vrot.slane %v2241, 4
    %v2243 = vmax.f32 %v2241, %v2242
    %v2244 = vrot.slane %v2243, 2
    %v2245 = vmax.f32 %v2243, %v2244
    %v2246 = vrot.slane %v2245, 1
    %v2247 = vmax.f32 %v2245, %v2246
    %v2248 = vsel %vm2198, %v2189, -inf
    %v2249 = vrot.slane %v2248, 4
    %v2250 = vmax.f32 %v2248, %v2249
    %v2251 = vrot.slane %v2250, 2
    %v2252 = vmax.f32 %v2250, %v2251
    %v2253 = vrot.slane %v2252, 1
    %v2254 = vmax.f32 %v2252, %v2253
    %v2255 = vld [vmem:[#allocation5 + $0x80] sm:$0xff]
    %v2256 = vld [vmem:[#allocation5 + $0x88] sm:$0xff]
    %v2257 = vld [vmem:[#allocation5 + $0x90] sm:$0xff]
    %v2258 = vld [vmem:[#allocation5 + $0x98] sm:$0xff]
    %v2259 = vld [vmem:[#allocation5 + $0xa0] sm:$0xff]
    %v2260 = vld [vmem:[#allocation5 + $0xa8] sm:$0xff]
    %v2261 = vld [vmem:[#allocation5 + $0xb0] sm:$0xff]
    %v2262 = vld [vmem:[#allocation5 + $0xb8] sm:$0xff]
    %v2263 = vld [vmem:[#allocation5 + $0xc0] sm:$0xff]
    %v2264 = vld [vmem:[#allocation5 + $0xc8] sm:$0xff]
    %v2265 = vld [vmem:[#allocation5 + $0xd0] sm:$0xff]
    %v2266 = vld [vmem:[#allocation5 + $0xd8] sm:$0xff]
    %v2267 = vld [vmem:[#allocation5 + $0xe0] sm:$0xff]
    %v2268 = vld [vmem:[#allocation5 + $0xe8] sm:$0xff]
    %v2269 = vld [vmem:[#allocation5 + $0xf0] sm:$0xff]
    %v2270 = vld [vmem:[#allocation5 + $0xf8] sm:$0xff]
    %v2271 = vld [vmem:[#allocation5 + $0x301] sm:$0x1]
    %v2272 = vlaneseq
    %v2273 = vshrl.u32 %v2272, 7
    %v2274 = vsub.s32 0, %v2273
    %v2275 = vrot.slane %v2271, %v2274
    %vm2284 = vcmask 1041409
    %v2285 = vsel %vm2284, %v2212, %v2205
    %vm2286 = vcmask 1042434
    %v2287 = vsel %vm2286, %v2219, %v2285
    %vm2288 = vcmask 1043459
    %v2289 = vsel %vm2288, %v2226, %v2287
    %vm2290 = vcmask 1044484
    %v2291 = vsel %vm2290, %v2233, %v2289
    %vm2292 = vcmask 1045509
    %v2293 = vsel %vm2292, %v2240, %v2291
    %vm2294 = vcmask 1046534
    %v2295 = vsel %vm2294, %v2247, %v2293
    %vm2296 = vcmask 1047559
    %v2297 = vsel %vm2296, %v2254, %v2295
    %2299 = vmatprep.subr.mxu0 0.0
    %2300 = vmatpush1.msra.mxu0 %v2270
    %2301 = vmatprep.subr.mxu0 0.0
    %2302 = vmatpush1.msra.mxu0 %v2269
    %2303 = vmatprep.subr.mxu0 0.0
    %2304 = vmatpush1.msra.mxu0 %v2268
    %2305 = vmatprep.subr.mxu0 0.0
    %2306 = vmatpush1.msra.mxu0 %v2267
    %2307 = vmatprep.subr.mxu0 0.0
    %2308 = vmatpush1.msra.mxu0 %v2266
    %2309 = vmatprep.subr.mxu0 0.0
    %2310 = vmatpush1.msra.mxu0 %v2265
    %2311 = vmatprep.subr.mxu0 0.0
    %2312 = vmatpush1.msra.mxu0 %v2264
    %2313 = vmatprep.subr.mxu0 0.0
    %2314 = vmatpush1.msra.mxu0 %v2263
    %2315 = vmatprep.subr.mxu0 0.0
    %2316 = vmatpush1.msra.mxu0 %v2262
    %2317 = vmatprep.subr.mxu0 0.0
    %2318 = vmatpush1.msra.mxu0 %v2261
    %2319 = vmatprep.subr.mxu0 0.0
    %2320 = vmatpush1.msra.mxu0 %v2260
    %2321 = vmatprep.subr.mxu0 0.0
    %2322 = vmatpush1.msra.mxu0 %v2259
    %2323 = vmatprep.subr.mxu0 0.0
    %2324 = vmatpush1.msra.mxu0 %v2258
    %2325 = vmatprep.subr.mxu0 0.0
    %2326 = vmatpush1.msra.mxu0 %v2257
    %2327 = vmatprep.subr.mxu0 0.0
    %2328 = vmatpush1.msra.mxu0 %v2256
    %2329 = vmatprep.subr.mxu0 0.0
    %2330 = vmatpush1.msra.mxu0 %v2255
    %2331 = vmatprep.subr.mxu0 0.0
    %2332 = vmatpush2.msra.mxu0 0.0
    %2333 = vmatprep.subr.mxu0 0.0
    %2334 = vmatpush2.msra.mxu0 0.0
    %2335 = vmatprep.subr.mxu0 0.0
    %2336 = vmatpush2.msra.mxu0 0.0
    %2337 = vmatprep.subr.mxu0 0.0
    %2338 = vmatpush2.msra.mxu0 0.0
    %2339 = vmatprep.subr.mxu0 0.0
    %2340 = vmatpush2.msra.mxu0 0.0
    %2341 = vmatprep.subr.mxu0 0.0
    %2342 = vmatpush2.msra.mxu0 0.0
    %2343 = vmatprep.subr.mxu0 0.0
    %2344 = vmatpush2.msra.mxu0 0.0
    %2345 = vmatprep.subr.mxu0 0.0
    %2346 = vmatpush2.msra.mxu0 0.0
    %2347 = vmatprep.subr.mxu0 0.0
    %2348 = vmatpush2.msra.mxu0 0.0
    %2349 = vmatprep.subr.mxu0 0.0
    %2350 = vmatpush2.msra.mxu0 0.0
    %2351 = vmatprep.subr.mxu0 0.0
    %2352 = vmatpush2.msra.mxu0 0.0
    %2353 = vmatprep.subr.mxu0 0.0
    %2354 = vmatpush2.msra.mxu0 0.0
    %2355 = vmatprep.subr.mxu0 0.0
    %2356 = vmatpush2.msra.mxu0 0.0
    %2357 = vmatprep.subr.mxu0 0.0
    %2358 = vmatpush2.msra.mxu0 0.0
    %2359 = vmatprep.subr.mxu0 0.0
    %2360 = vmatpush2.msra.mxu0 0.0
    %2361 = vmatprep.subr.mxu0 0.0
    %2362 = vmatpush2.msra.mxu0 0.0
    %2363 = vmatprep.mubr.f32.mxu0 0.0
    %2364 = vmatmul.mubr.f32.gmra.mxu0 %v2297
    %v2365 = vpop.f32.mrf.mxu0
    %v2366 = vadd.f32 %v2275, %v2365
    %v2367 = vpop.f32.mrf.mxu0
    %2368 = vdwg.mxu0
    %v2369 = vmax.f32 %v2366, 0.0
    %v2370 = vld [vmem:[#allocation5 + $0x100] sm:$0xff]
    %v2371 = vld [vmem:[#allocation5 + $0x108] sm:$0xff]
    %v2372 = vld [vmem:[#allocation5 + $0x110] sm:$0xff]
    %v2373 = vld [vmem:[#allocation5 + $0x118] sm:$0xff]
    %v2374 = vld [vmem:[#allocation5 + $0x120] sm:$0xff]
    %v2375 = vld [vmem:[#allocation5 + $0x128] sm:$0xff]
    %v2376 = vld [vmem:[#allocation5 + $0x130] sm:$0xff]
    %v2377 = vld [vmem:[#allocation5 + $0x138] sm:$0xff]
    %v2378 = vld [vmem:[#allocation5 + $0x140] sm:$0xff]
    %v2379 = vld [vmem:[#allocation5 + $0x148] sm:$0xff]
    %v2380 = vld [vmem:[#allocation5 + $0x150] sm:$0xff]
    %v2381 = vld [vmem:[#allocation5 + $0x158] sm:$0xff]
    %v2382 = vld [vmem:[#allocation5 + $0x160] sm:$0xff]
    %v2383 = vld [vmem:[#allocation5 + $0x168] sm:$0xff]
    %v2384 = vld [vmem:[#allocation5 + $0x170] sm:$0xff]
    %v2385 = vld [vmem:[#allocation5 + $0x178] sm:$0xff]
    %v2386 = vld [vmem:[#allocation5 + $0x302] sm:$0x1]
    %v2387 = vlaneseq
    %v2388 = vshrl.u32 %v2387, 7
    %v2389 = vsub.s32 0, %v2388
    %v2390 = vrot.slane %v2386, %v2389
    %2391 = vmatprep.subr.mxu0 0.0
    %2392 = vmatpush1.msra.mxu0 %v2385
    %2393 = vmatprep.subr.mxu0 0.0
    %2394 = vmatpush1.msra.mxu0 %v2384
    %2395 = vmatprep.subr.mxu0 0.0
    %2396 = vmatpush1.msra.mxu0 %v2383
    %2397 = vmatprep.subr.mxu0 0.0
    %2398 = vmatpush1.msra.mxu0 %v2382
    %2399 = vmatprep.subr.mxu0 0.0
    %2400 = vmatpush1.msra.mxu0 %v2381
    %2401 = vmatprep.subr.mxu0 0.0
    %2402 = vmatpush1.msra.mxu0 %v2380
    %2403 = vmatprep.subr.mxu0 0.0
    %2404 = vmatpush1.msra.mxu0 %v2379
    %2405 = vmatprep.subr.mxu0 0.0
    %2406 = vmatpush1.msra.mxu0 %v2378
    %2407 = vmatprep.subr.mxu0 0.0
    %2408 = vmatpush1.msra.mxu0 %v2377
    %2409 = vmatprep.subr.mxu0 0.0
    %2410 = vmatpush1.msra.mxu0 %v2376
    %2411 = vmatprep.subr.mxu0 0.0
    %2412 = vmatpush1.msra.mxu0 %v2375
    %2413 = vmatprep.subr.mxu0 0.0
    %2414 = vmatpush1.msra.mxu0 %v2374
    %2415 = vmatprep.subr.mxu0 0.0
    %2416 = vmatpush1.msra.mxu0 %v2373
    %2417 = vmatprep.subr.mxu0 0.0
    %2418 = vmatpush1.msra.mxu0 %v2372
    %2419 = vmatprep.subr.mxu0 0.0
    %2420 = vmatpush1.msra.mxu0 %v2371
    %2421 = vmatprep.subr.mxu0 0.0
    %2422 = vmatpush1.msra.mxu0 %v2370
    %2423 = vmatprep.subr.mxu0 0.0
    %2424 = vmatpush2.msra.mxu0 0.0
    %2425 = vmatprep.subr.mxu0 0.0
    %2426 = vmatpush2.msra.mxu0 0.0
    %2427 = vmatprep.subr.mxu0 0.0
    %2428 = vmatpush2.msra.mxu0 0.0
    %2429 = vmatprep.subr.mxu0 0.0
    %2430 = vmatpush2.msra.mxu0 0.0
    %2431 = vmatprep.subr.mxu0 0.0
    %2432 = vmatpush2.msra.mxu0 0.0
    %2433 = vmatprep.subr.mxu0 0.0
    %2434 = vmatpush2.msra.mxu0 0.0
    %2435 = vmatprep.subr.mxu0 0.0
    %2436 = vmatpush2.msra.mxu0 0.0
    %2437 = vmatprep.subr.mxu0 0.0
    %2438 = vmatpush2.msra.mxu0 0.0
    %2439 = vmatprep.subr.mxu0 0.0
    %2440 = vmatpush2.msra.mxu0 0.0
    %2441 = vmatprep.subr.mxu0 0.0
    %2442 = vmatpush2.msra.mxu0 0.0
    %2443 = vmatprep.subr.mxu0 0.0
    %2444 = vmatpush2.msra.mxu0 0.0
    %2445 = vmatprep.subr.mxu0 0.0
    %2446 = vmatpush2.msra.mxu0 0.0
    %2447 = vmatprep.subr.mxu0 0.0
    %2448 = vmatpush2.msra.mxu0 0.0
    %2449 = vmatprep.subr.mxu0 0.0
    %2450 = vmatpush2.msra.mxu0 0.0
    %2451 = vmatprep.subr.mxu0 0.0
    %2452 = vmatpush2.msra.mxu0 0.0
    %2453 = vmatprep.subr.mxu0 0.0
    %2454 = vmatpush2.msra.mxu0 0.0
    %2455 = vmatprep.mubr.f32.mxu0 0.0
    %2456 = vmatmul.mubr.f32.gmra.mxu0 %v2369
    %v2457 = vpop.f32.mrf.mxu0
    %v2458 = vadd.f32 %v2390, %v2457
    %v2459 = vpop.f32.mrf.mxu0
    %2460 = vdwg.mxu0
    %v2461 = vld [vmem:[#allocation5 + $0x180] sm:$0xff]
    %v2462 = vld [vmem:[#allocation5 + $0x188] sm:$0xff]
    %v2463 = vld [vmem:[#allocation5 + $0x190] sm:$0xff]
    %v2464 = vld [vmem:[#allocation5 + $0x198] sm:$0xff]
    %v2465 = vld [vmem:[#allocation5 + $0x1a0] sm:$0xff]
    %v2466 = vld [vmem:[#allocation5 + $0x1a8] sm:$0xff]
    %v2467 = vld [vmem:[#allocation5 + $0x1b0] sm:$0xff]
    %v2468 = vld [vmem:[#allocation5 + $0x1b8] sm:$0xff]
    %v2469 = vld [vmem:[#allocation5 + $0x1c0] sm:$0xff]
    %v2470 = vld [vmem:[#allocation5 + $0x1c8] sm:$0xff]
    %v2471 = vld [vmem:[#allocation5 + $0x1d0] sm:$0xff]
    %v2472 = vld [vmem:[#allocation5 + $0x1d8] sm:$0xff]
    %v2473 = vld [vmem:[#allocation5 + $0x1e0] sm:$0xff]
    %v2474 = vld [vmem:[#allocation5 + $0x1e8] sm:$0xff]
    %v2475 = vld [vmem:[#allocation5 + $0x1f0] sm:$0xff]
    %v2476 = vld [vmem:[#allocation5 + $0x1f8] sm:$0xff]
    %v2477 = vld [vmem:[#allocation5 + $0x303] sm:$0x1]
    %v2478 = vlaneseq
    %v2479 = vshrl.u32 %v2478, 7
    %v2480 = vsub.s32 0, %v2479
    %v2481 = vrot.slane %v2477, %v2480
    %2482 = vmatprep.subr.mxu0 0.0
    %2483 = vmatpush1.msra.mxu0 %v2476
    %2484 = vmatprep.subr.mxu0 0.0
    %2485 = vmatpush1.msra.mxu0 %v2475
    %2486 = vmatprep.subr.mxu0 0.0
    %2487 = vmatpush1.msra.mxu0 %v2474
    %2488 = vmatprep.subr.mxu0 0.0
    %2489 = vmatpush1.msra.mxu0 %v2473
    %2490 = vmatprep.subr.mxu0 0.0
    %2491 = vmatpush1.msra.mxu0 %v2472
    %2492 = vmatprep.subr.mxu0 0.0
    %2493 = vmatpush1.msra.mxu0 %v2471
    %2494 = vmatprep.subr.mxu0 0.0
    %2495 = vmatpush1.msra.mxu0 %v2470
    %2496 = vmatprep.subr.mxu0 0.0
    %2497 = vmatpush1.msra.mxu0 %v2469
    %2498 = vmatprep.subr.mxu0 0.0
    %2499 = vmatpush1.msra.mxu0 %v2468
    %2500 = vmatprep.subr.mxu0 0.0
    %2501 = vmatpush1.msra.mxu0 %v2467
    %2502 = vmatprep.subr.mxu0 0.0
    %2503 = vmatpush1.msra.mxu0 %v2466
    %2504 = vmatprep.subr.mxu0 0.0
    %2505 = vmatpush1.msra.mxu0 %v2465
    %2506 = vmatprep.subr.mxu0 0.0
    %2507 = vmatpush1.msra.mxu0 %v2464
    %2508 = vmatprep.subr.mxu0 0.0
    %2509 = vmatpush1.msra.mxu0 %v2463
    %2510 = vmatprep.subr.mxu0 0.0
    %2511 = vmatpush1.msra.mxu0 %v2462
    %2512 = vmatprep.subr.mxu0 0.0
    %2513 = vmatpush1.msra.mxu0 %v2461
    %2514 = vmatprep.subr.mxu0 0.0
    %2515 = vmatpush2.msra.mxu0 0.0
    %2516 = vmatprep.subr.mxu0 0.0
    %2517 = vmatpush2.msra.mxu0 0.0
    %2518 = vmatprep.subr.mxu0 0.0
    %2519 = vmatpush2.msra.mxu0 0.0
    %2520 = vmatprep.subr.mxu0 0.0
    %2521 = vmatpush2.msra.mxu0 0.0
    %2522 = vmatprep.subr.mxu0 0.0
    %2523 = vmatpush2.msra.mxu0 0.0
    %2524 = vmatprep.subr.mxu0 0.0
    %2525 = vmatpush2.msra.mxu0 0.0
    %2526 = vmatprep.subr.mxu0 0.0
    %2527 = vmatpush2.msra.mxu0 0.0
    %2528 = vmatprep.subr.mxu0 0.0
    %2529 = vmatpush2.msra.mxu0 0.0
    %2530 = vmatprep.subr.mxu0 0.0
    %2531 = vmatpush2.msra.mxu0 0.0
    %2532 = vmatprep.subr.mxu0 0.0
    %2533 = vmatpush2.msra.mxu0 0.0
    %2534 = vmatprep.subr.mxu0 0.0
    %2535 = vmatpush2.msra.mxu0 0.0
    %2536 = vmatprep.subr.mxu0 0.0
    %2537 = vmatpush2.msra.mxu0 0.0
    %2538 = vmatprep.subr.mxu0 0.0
    %2539 = vmatpush2.msra.mxu0 0.0
    %2540 = vmatprep.subr.mxu0 0.0
    %2541 = vmatpush2.msra.mxu0 0.0
    %2542 = vmatprep.subr.mxu0 0.0
    %2543 = vmatpush2.msra.mxu0 0.0
    %2544 = vmatprep.subr.mxu0 0.0
    %2545 = vmatpush2.msra.mxu0 0.0
    %2546 = vmatprep.mubr.f32.mxu0 0.0
    %2547 = vmatmul.mubr.f32.gmra.mxu0 %v2369
    %v2548 = vpop.f32.mrf.mxu0
    %v2549 = vadd.f32 %v2481, %v2548
    %v2550 = vpop.f32.mrf.mxu0
    %2551 = vdwg.mxu0
    %v2552 = vmax.f32 %v2549, 0.0
    %v2553 = vld [vmem:[#allocation5 + $0x200] sm:$0xff]
    %v2554 = vld [vmem:[#allocation5 + $0x208] sm:$0xff]
    %v2555 = vld [vmem:[#allocation5 + $0x210] sm:$0xff]
    %v2556 = vld [vmem:[#allocation5 + $0x218] sm:$0xff]
    %v2557 = vld [vmem:[#allocation5 + $0x220] sm:$0xff]
    %v2558 = vld [vmem:[#allocation5 + $0x228] sm:$0xff]
    %v2559 = vld [vmem:[#allocation5 + $0x230] sm:$0xff]
    %v2560 = vld [vmem:[#allocation5 + $0x238] sm:$0xff]
    %v2561 = vld [vmem:[#allocation5 + $0x240] sm:$0xff]
    %v2562 = vld [vmem:[#allocation5 + $0x248] sm:$0xff]
    %v2563 = vld [vmem:[#allocation5 + $0x250] sm:$0xff]
    %v2564 = vld [vmem:[#allocation5 + $0x258] sm:$0xff]
    %v2565 = vld [vmem:[#allocation5 + $0x260] sm:$0xff]
    %v2566 = vld [vmem:[#allocation5 + $0x268] sm:$0xff]
    %v2567 = vld [vmem:[#allocation5 + $0x270] sm:$0xff]
    %v2568 = vld [vmem:[#allocation5 + $0x278] sm:$0xff]
    %v2569 = vld [vmem:[#allocation5 + $0x304] sm:$0x1]
    %2570 = vmatprep.subr.mxu0 0.0
    %2571 = vmatpush1.msra.mxu0 %v2568
    %2572 = vmatprep.subr.mxu0 0.0
    %2573 = vmatpush1.msra.mxu0 %v2567
    %2574 = vmatprep.subr.mxu0 0.0
    %2575 = vmatpush1.msra.mxu0 %v2566
    %2576 = vmatprep.subr.mxu0 0.0
    %2577 = vmatpush1.msra.mxu0 %v2565
    %2578 = vmatprep.subr.mxu0 0.0
    %2579 = vmatpush1.msra.mxu0 %v2564
    %2580 = vmatprep.subr.mxu0 0.0
    %2581 = vmatpush1.msra.mxu0 %v2563
    %2582 = vmatprep.subr.mxu0 0.0
    %2583 = vmatpush1.msra.mxu0 %v2562
    %2584 = vmatprep.subr.mxu0 0.0
    %2585 = vmatpush1.msra.mxu0 %v2561
    %2586 = vmatprep.subr.mxu0 0.0
    %2587 = vmatpush1.msra.mxu0 %v2560
    %2588 = vmatprep.subr.mxu0 0.0
    %2589 = vmatpush1.msra.mxu0 %v2559
    %2590 = vmatprep.subr.mxu0 0.0
    %2591 = vmatpush1.msra.mxu0 %v2558
    %2592 = vmatprep.subr.mxu0 0.0
    %2593 = vmatpush1.msra.mxu0 %v2557
    %2594 = vmatprep.subr.mxu0 0.0
    %2595 = vmatpush1.msra.mxu0 %v2556
    %2596 = vmatprep.subr.mxu0 0.0
    %2597 = vmatpush1.msra.mxu0 %v2555
    %2598 = vmatprep.subr.mxu0 0.0
    %2599 = vmatpush1.msra.mxu0 %v2554
    %2600 = vmatprep.subr.mxu0 0.0
    %2601 = vmatpush1.msra.mxu0 %v2553
    %2602 = vmatprep.subr.mxu0 0.0
    %2603 = vmatpush2.msra.mxu0 0.0
    %2604 = vmatprep.subr.mxu0 0.0
    %2605 = vmatpush2.msra.mxu0 0.0
    %2606 = vmatprep.subr.mxu0 0.0
    %2607 = vmatpush2.msra.mxu0 0.0
    %2608 = vmatprep.subr.mxu0 0.0
    %2609 = vmatpush2.msra.mxu0 0.0
    %2610 = vmatprep.subr.mxu0 0.0
    %2611 = vmatpush2.msra.mxu0 0.0
    %2612 = vmatprep.subr.mxu0 0.0
    %2613 = vmatpush2.msra.mxu0 0.0
    %2614 = vmatprep.subr.mxu0 0.0
    %2615 = vmatpush2.msra.mxu0 0.0
    %2616 = vmatprep.subr.mxu0 0.0
    %2617 = vmatpush2.msra.mxu0 0.0
    %2618 = vmatprep.subr.mxu0 0.0
    %2619 = vmatpush2.msra.mxu0 0.0
    %2620 = vmatprep.subr.mxu0 0.0
    %2621 = vmatpush2.msra.mxu0 0.0
    %2622 = vmatprep.subr.mxu0 0.0
    %2623 = vmatpush2.msra.mxu0 0.0
    %2624 = vmatprep.subr.mxu0 0.0
    %2625 = vmatpush2.msra.mxu0 0.0
    %2626 = vmatprep.subr.mxu0 0.0
    %2627 = vmatpush2.msra.mxu0 0.0
    %2628 = vmatprep.subr.mxu0 0.0
    %2629 = vmatpush2.msra.mxu0 0.0
    %2630 = vmatprep.subr.mxu0 0.0
    %2631 = vmatpush2.msra.mxu0 0.0
    %2632 = vmatprep.subr.mxu0 0.0
    %2633 = vmatpush2.msra.mxu0 0.0
    %2634 = vmatprep.mubr.f32.mxu0 0.0
    %2635 = vmatmul.mubr.f32.gmra.mxu0 %v2552
    %v2636 = vpop.f32.mrf.mxu0
    %v2637 = vadd.f32 0.0, %v2636
    %v2638 = vpop.f32.mrf.mxu0
    %2639 = vdwg.mxu0
    %v2640 = vadd.f32 %v2458, %v2637
    %v2641 = vlaneseq
    %v2642 = vshrl.u32 %v2641, 7
    %v2643 = vsub.s32 0, %v2642
    %v2644 = vrot.slane %v2569, %v2643
    %v2645 = vadd.f32 %v2640, %v2644
    %v2646 = vmax.f32 %v2645, 0.0
    %v2647 = vld [vmem:[#allocation5 + $0x280] sm:$0xff]
    %v2648 = vld [vmem:[#allocation5 + $0x288] sm:$0xff]
    %v2649 = vld [vmem:[#allocation5 + $0x290] sm:$0xff]
    %v2650 = vld [vmem:[#allocation5 + $0x298] sm:$0xff]
    %v2651 = vld [vmem:[#allocation5 + $0x2a0] sm:$0xff]
    %v2652 = vld [vmem:[#allocation5 + $0x2a8] sm:$0xff]
    %v2653 = vld [vmem:[#allocation5 + $0x2b0] sm:$0xff]
    %v2654 = vld [vmem:[#allocation5 + $0x2b8] sm:$0xff]
    %v2655 = vld [vmem:[#allocation5 + $0x2c0] sm:$0xff]
    %v2656 = vld [vmem:[#allocation5 + $0x2c8] sm:$0xff]
    %v2657 = vld [vmem:[#allocation5 + $0x2d0] sm:$0xff]
    %v2658 = vld [vmem:[#allocation5 + $0x2d8] sm:$0xff]
    %v2659 = vld [vmem:[#allocation5 + $0x2e0] sm:$0xff]
    %v2660 = vld [vmem:[#allocation5 + $0x2e8] sm:$0xff]
    %v2661 = vld [vmem:[#allocation5 + $0x2f0] sm:$0xff]
    %v2662 = vld [vmem:[#allocation5 + $0x2f8] sm:$0xff]
    %v2663 = vld [vmem:[#allocation5 + $0x305] sm:$0x1]
    %v2664 = vlaneseq
    %v2665 = vshrl.u32 %v2664, 7
    %v2666 = vsub.s32 0, %v2665
    %v2667 = vrot.slane %v2663, %v2666
    %2668 = vmatprep.subr.mxu0 0.0
    %2669 = vmatpush1.msra.mxu0 %v2662
    %2670 = vmatprep.subr.mxu0 0.0
    %2671 = vmatpush1.msra.mxu0 %v2661
    %2672 = vmatprep.subr.mxu0 0.0
    %2673 = vmatpush1.msra.mxu0 %v2660
    %2674 = vmatprep.subr.mxu0 0.0
    %2675 = vmatpush1.msra.mxu0 %v2659
    %2676 = vmatprep.subr.mxu0 0.0
    %2677 = vmatpush1.msra.mxu0 %v2658
    %2678 = vmatprep.subr.mxu0 0.0
    %2679 = vmatpush1.msra.mxu0 %v2657
    %2680 = vmatprep.subr.mxu0 0.0
    %2681 = vmatpush1.msra.mxu0 %v2656
    %2682 = vmatprep.subr.mxu0 0.0
    %2683 = vmatpush1.msra.mxu0 %v2655
    %2684 = vmatprep.subr.mxu0 0.0
    %2685 = vmatpush1.msra.mxu0 %v2654
    %2686 = vmatprep.subr.mxu0 0.0
    %2687 = vmatpush1.msra.mxu0 %v2653
    %2688 = vmatprep.subr.mxu0 0.0
    %2689 = vmatpush1.msra.mxu0 %v2652
    %2690 = vmatprep.subr.mxu0 0.0
    %2691 = vmatpush1.msra.mxu0 %v2651
    %2692 = vmatprep.subr.mxu0 0.0
    %2693 = vmatpush1.msra.mxu0 %v2650
    %2694 = vmatprep.subr.mxu0 0.0
    %2695 = vmatpush1.msra.mxu0 %v2649
    %2696 = vmatprep.subr.mxu0 0.0
    %2697 = vmatpush1.msra.mxu0 %v2648
    %2698 = vmatprep.subr.mxu0 0.0
    %2699 = vmatpush1.msra.mxu0 %v2647
    %2700 = vmatprep.subr.mxu0 0.0
    %2701 = vmatpush2.msra.mxu0 0.0
    %2702 = vmatprep.subr.mxu0 0.0
    %2703 = vmatpush2.msra.mxu0 0.0
    %2704 = vmatprep.subr.mxu0 0.0
    %2705 = vmatpush2.msra.mxu0 0.0
    %2706 = vmatprep.subr.mxu0 0.0
    %2707 = vmatpush2.msra.mxu0 0.0
    %2708 = vmatprep.subr.mxu0 0.0
    %2709 = vmatpush2.msra.mxu0 0.0
    %2710 = vmatprep.subr.mxu0 0.0
    %2711 = vmatpush2.msra.mxu0 0.0
    %2712 = vmatprep.subr.mxu0 0.0
    %2713 = vmatpush2.msra.mxu0 0.0
    %2714 = vmatprep.subr.mxu0 0.0
    %2715 = vmatpush2.msra.mxu0 0.0
    %2716 = vmatprep.subr.mxu0 0.0
    %2717 = vmatpush2.msra.mxu0 0.0
    %2718 = vmatprep.subr.mxu0 0.0
    %2719 = vmatpush2.msra.mxu0 0.0
    %2720 = vmatprep.subr.mxu0 0.0
    %2721 = vmatpush2.msra.mxu0 0.0
    %2722 = vmatprep.subr.mxu0 0.0
    %2723 = vmatpush2.msra.mxu0 0.0
    %2724 = vmatprep.subr.mxu0 0.0
    %2725 = vmatpush2.msra.mxu0 0.0
    %2726 = vmatprep.subr.mxu0 0.0
    %2727 = vmatpush2.msra.mxu0 0.0
    %2728 = vmatprep.subr.mxu0 0.0
    %2729 = vmatpush2.msra.mxu0 0.0
    %2730 = vmatprep.subr.mxu0 0.0
    %2731 = vmatpush2.msra.mxu0 0.0
    %2732 = vmatprep.mubr.f32.mxu0 0.0
    %2733 = vmatmul.mubr.f32.gmra.mxu0 %v2646
    %v2734 = vpop.f32.mrf.mxu0
    %v2735 = vadd.f32 %v2667, %v2734
    %v2736 = vpop.f32.mrf.mxu0
    %2737 = vdwg.mxu0
    %2738 = vst [vmem:[#allocation7] sm:$0xff] %v2735
    // Predicated region
    $region18: #{tpu_custom_call.1} parent=1 // pred_check
      _
    $region19: #{tpu_custom_call.1} parent=1 // pred_check_branch
      %2740 = sbr.rel (0) target = $region21
    $region20: #{tpu_custom_call.1} parent=1 // pred_region
      %s2742 = ssub.s32 128, 128
      %2743 = vsyncadd [#allocation4], %s2742
      %s2745 = sshll.u32 [#allocation7], 4
      %s2746 = int_to_ptr.vmem [resolvable:$true] %s2745
      %2748 = dma.vmem_to_hbm [thread:$0]  %s2746, 128, %s2, [#allocation4]
    $region21: #{tpu_custom_call.1} parent=1 // pred_fallthru
      _
    // Predicated region
    $region22: #{tpu_custom_call.1} parent=1 // pred_check
      _
    $region23: #{tpu_custom_call.1} parent=1 // pred_check_branch
      %2750 = sbr.rel (0) target = $region25
    $region24: #{tpu_custom_call.1} parent=1 // pred_region
      %2751 = dma.done [#allocation4], 128
    $region25: #{tpu_custom_call.1} parent=1 // pred_fallthru
      _
    %2752 = vsyncpa [#allocation3], 1
    %2753 = vsyncpa [#allocation6], 1
    %2754 = vsyncpa [#allocation4], 1

</llo_original>
